<compile_context>
chip_gen: v5e
topology: v5e:2x2
jax: 0.10.0
libtpu: 0.0.40
codegen_flags: <defaults>
</compile_context>

<pallas_src>
import functools
import math

import jax
import jax.numpy as jnp
import numpy as np
from jax.experimental import pallas as pl
from jax.experimental.pallas import tpu as pltpu

LN_EPS = 1e-5


def _layernorm(v, g, b):
    mu = jnp.mean(v, axis=-1, keepdims=True)
    var = jnp.mean((v - mu) ** 2, axis=-1, keepdims=True)
    return (v - mu) * jax.lax.rsqrt(var + LN_EPS) * g + b


def _gelu_exact(v):
    # PyTorch nn.GELU default (erf-based, not tanh approximation), in f32.
    return 0.5 * v * (1.0 + jax.lax.erf(v * (1.0 / math.sqrt(2.0))))


def encoder_block_kernel(n_heads,
                         x_ref, g1_ref, be1_ref,
                         wq_ref, bq_ref, wk_ref, bk_ref, wv_ref, bv_ref,
                         wo_ref, bo_ref,
                         g2_ref, be2_ref,
                         w1_ref, b1_ref, w2_ref, b2_ref,
                         o_ref,
                         x1_scr, n2_scr, acc_scr):
    """Grid = (batch_blocks, H_tiles).  Attention + LN run once per batch block
    (at H-tile 0); the MLP accumulates over H tiles into a VMEM scratch."""
    h_step = pl.program_id(1)
    nb, L, E = x_ref.shape
    hd = E // n_heads
    M = nb * L
    mm_dtype = wq_ref.dtype          # bf16 matmul operands, f32 accumulation

    @pl.when(h_step == 0)
    def _attention_and_norms():
        x = x_ref[...].reshape(M, E).astype(jnp.float32)

        # ----- LayerNorm 1 (f32) -----
        n1 = _layernorm(x, g1_ref[...], be1_ref[...])
        n1m = n1.astype(mm_dtype)

        # ----- Q / K / V projections (scale already folded into wq/bq on host) -----
        q = jnp.dot(n1m, wq_ref[...], preferred_element_type=jnp.float32) + bq_ref[...]
        k = jnp.dot(n1m, wk_ref[...], preferred_element_type=jnp.float32) + bk_ref[...]
        v = jnp.dot(n1m, wv_ref[...], preferred_element_type=jnp.float32) + bv_ref[...]
        qb = q.reshape(nb, L, E).astype(mm_dtype)
        kb = k.reshape(nb, L, E).astype(mm_dtype)
        vb = v.reshape(nb, L, E).astype(mm_dtype)

        wo = wo_ref[...]             # (E, E) bf16, sliced per head below

        # Per-head attention accumulated straight into the output projection:
        #   att = sum_h ctx_h @ wo[h*hd:(h+1)*hd, :]  ==  concat_h(ctx_h) @ wo
        # (no concatenate, only one (L,L) score matrix live at a time).
        att = jnp.zeros((M, E), jnp.float32)
        for h in range(n_heads):                     # static -> unrolled
            sl = slice(h * hd, (h + 1) * hd)
            s = jnp.einsum("bld,bmd->blm", qb[:, :, sl], kb[:, :, sl],
                           preferred_element_type=jnp.float32)        # (nb, L, L)
            s = s - jnp.max(s, axis=-1, keepdims=True)
            p = jnp.exp(s)
            p = p * pl.reciprocal(jnp.sum(p, axis=-1, keepdims=True), approx=True)
            ctx = jnp.einsum("blm,bmd->bld", p.astype(mm_dtype), vb[:, :, sl],
                             preferred_element_type=jnp.float32)       # (nb, L, hd)
            att = att + jnp.dot(ctx.reshape(M, hd).astype(mm_dtype), wo[sl, :],
                                preferred_element_type=jnp.float32)
        # attention dropout is identity in eval mode
        x1 = x + att + bo_ref[...]

        # ----- residual + LayerNorm 2 (f32), stash for the H-tiled MLP -----
        x1_scr[...] = x1
        n2_scr[...] = _layernorm(x1, g2_ref[...], be2_ref[...])
        acc_scr[...] = jnp.zeros_like(acc_scr)

    # ----- MLP, tiled over the hidden dimension H (fc2 accumulated in f32) -----
    n2m = n2_scr[...].astype(mm_dtype)
    h1 = jnp.dot(n2m, w1_ref[...], preferred_element_type=jnp.float32) + b1_ref[...]
    h1 = _gelu_exact(h1)
    # TODO(synk): nn.Dropout layers run in eval mode (identity); no RNG masking applied.
    acc_scr[...] += jnp.dot(h1.astype(mm_dtype), w2_ref[...],
                            preferred_element_type=jnp.float32)

    @pl.when(h_step == pl.num_programs(1) - 1)
    def _write_out():
        out = x1_scr[...] + acc_scr[...] + b2_ref[...]
        o_ref[...] = out.reshape(nb, L, E).astype(o_ref.dtype)


def transformer_encoder_block(x, params, n_heads, *, batch_block=None, h_tile=None):
    """x: (L, N, E) seq-first (PyTorch nn.MultiheadAttention default). Returns (L, N, E)."""
    L, N, E = x.shape
    H = params["w1"].shape[0]
    hd = E // n_heads
    scale = 1.0 / math.sqrt(hd)

    # Batch-first so each grid block is (nb, L, E) with full last-two dims (clean
    # (8,128) tiling).  No dtype cast here; the kernel handles the input dtype.
    xb = jnp.transpose(x, (1, 0, 2))                # (N, L, E)

    # Batch block: prefer >= 2 grid steps (v7x 2-TC sharding / pipelining) while
    # folding as many batch rows as possible into the matmul M dimension.
    if batch_block is None:
        candidates = [c for c in range(1, min(N, 8) + 1) if N % c == 0]
        multi = [c for c in candidates if N // c >= 2]
        batch_block = max(multi) if multi else max(candidates)
    nb = batch_block
    assert N % nb == 0

    # H tile: multiple of 128 (or full H) so w1/w2 blocks stay lane/sublane aligned.
    if h_tile is None:
        h_tile = 512 if (H > 512 and H % 512 == 0) else H
    assert H % h_tile == 0

    wdt = jnp.bfloat16                              # MXU operand dtype

    in_w = params["in_proj_w"]                      # (3E, E) rows = [Wq; Wk; Wv]
    in_b = params["in_proj_b"]                      # (3E,)
    wq = (in_w[0 * E:1 * E].T * scale).astype(wdt)  # scale folded into Q weights
    wk = in_w[1 * E:2 * E].T.astype(wdt)
    wv = in_w[2 * E:3 * E].T.astype(wdt)
    bq = (in_b[0 * E:1 * E] * scale).reshape(1, E).astype(jnp.float32)
    bk = in_b[1 * E:2 * E].reshape(1, E).astype(jnp.float32)
    bv = in_b[2 * E:3 * E].reshape(1, E).astype(jnp.float32)
    wo = params["out_proj_w"].T.astype(wdt)         # (E, E)
    bo = params["out_proj_b"].reshape(1, E).astype(jnp.float32)

    g1 = params["ln1_g"].reshape(1, E).astype(jnp.float32)
    be1 = params["ln1_b"].reshape(1, E).astype(jnp.float32)
    g2 = params["ln2_g"].reshape(1, E).astype(jnp.float32)
    be2 = params["ln2_b"].reshape(1, E).astype(jnp.float32)

    w1 = params["w1"].T.astype(wdt)                 # (E, H)
    b1 = params["b1"].reshape(1, H).astype(jnp.float32)
    w2 = params["w2"].T.astype(wdt)                 # (H, E)
    b2 = params["b2"].reshape(1, E).astype(jnp.float32)

    def fixed(shape):
        # Constant (grid-invariant) block: same block index every step, so Pallas
        # does not re-DMA it across grid iterations.
        return pl.BlockSpec(shape, lambda b, h, _s=len(shape): (0,) * _s)

    kernel = functools.partial(encoder_block_kernel, n_heads)

    out = pl.pallas_call(
        kernel,
        out_shape=jax.ShapeDtypeStruct((N, L, E), x.dtype),
        grid=(N // nb, H // h_tile),
        in_specs=[
            pl.BlockSpec((nb, L, E), lambda b, h: (b, 0, 0)),   # x (batch block)
            fixed((1, E)), fixed((1, E)),                        # LN1 gamma / beta
            fixed((E, E)), fixed((1, E)),                        # Wq (pre-scaled), bq
            fixed((E, E)), fixed((1, E)),                        # Wk, bk
            fixed((E, E)), fixed((1, E)),                        # Wv, bv
            fixed((E, E)), fixed((1, E)),                        # out_proj W, b
            fixed((1, E)), fixed((1, E)),                        # LN2 gamma / beta
            pl.BlockSpec((E, h_tile), lambda b, h: (0, h)),      # fc1 W tile
            pl.BlockSpec((1, h_tile), lambda b, h: (0, h)),      # fc1 b tile
            pl.BlockSpec((h_tile, E), lambda b, h: (h, 0)),      # fc2 W tile
            fixed((1, E)),                                       # fc2 b
        ],
        out_specs=pl.BlockSpec((nb, L, E), lambda b, h: (b, 0, 0)),
        scratch_shapes=[
            pltpu.VMEM((nb * L, E), jnp.float32),   # x1 (post-attention residual)
            pltpu.VMEM((nb * L, E), jnp.float32),   # LayerNorm2 output
            pltpu.VMEM((nb * L, E), jnp.float32),   # MLP fc2 accumulator
        ],
        compiler_params=pltpu.CompilerParams(
            dimension_semantics=("parallel", "arbitrary"),
            vmem_limit_bytes=48 * 1024 * 1024,
        ),
    )(xb, g1, be1, wq, bq, wk, bk, wv, bv, wo, bo, g2, be2, w1, b1, w2, b2)

    return jnp.transpose(out, (1, 0, 2))


def init_params(key, emb_dim, mlp_expansion):
    H = mlp_expansion * emb_dim
    ks = jax.random.split(key, 8)
    w = lambda k, s: jax.random.normal(k, s, jnp.float32) * 0.05
    return dict(
        ln1_g=jnp.ones((emb_dim,), jnp.float32),
        ln1_b=jnp.zeros((emb_dim,), jnp.float32),
        in_proj_w=w(ks[0], (3 * emb_dim, emb_dim)),
        in_proj_b=w(ks[1], (3 * emb_dim,)),
        out_proj_w=w(ks[2], (emb_dim, emb_dim)),
        out_proj_b=w(ks[3], (emb_dim,)),
        ln2_g=jnp.ones((emb_dim,), jnp.float32),
        ln2_b=jnp.zeros((emb_dim,), jnp.float32),
        w1=w(ks[4], (H, emb_dim)),
        b1=w(ks[5], (H,)),
        w2=w(ks[6], (emb_dim, H)),
        b2=w(ks[7], (emb_dim,)),
    )


def reference_block(x, p, n_heads):
    """Pure-JAX f32 mirror of the PyTorch forward (eval mode) for verification."""
    L, N, E = x.shape
    hd = E // n_heads

    def ln(v, g, b):
        mu = v.mean(-1, keepdims=True)
        var = ((v - mu) ** 2).mean(-1, keepdims=True)
        return (v - mu) / jnp.sqrt(var + LN_EPS) * g + b

    n1 = ln(x, p["ln1_g"], p["ln1_b"])
    qkv = n1 @ p["in_proj_w"].T + p["in_proj_b"]
    q, k, v = jnp.split(qkv, 3, axis=-1)
    to_heads = lambda t: t.reshape(L, N, n_heads, hd).transpose(1, 2, 0, 3)
    qh, kh, vh = to_heads(q), to_heads(k), to_heads(v)
    s = jnp.einsum("nhld,nhmd->nhlm", qh / math.sqrt(hd), kh)
    a = jax.nn.softmax(s, axis=-1)
    o = jnp.einsum("nhlm,nhmd->nhld", a, vh).transpose(2, 0, 1, 3).reshape(L, N, E)
    att = o @ p["out_proj_w"].T + p["out_proj_b"]
    x1 = x + att
    n2 = ln(x1, p["ln2_g"], p["ln2_b"])
    h1 = n2 @ p["w1"].T + p["b1"]
    h1 = 0.5 * h1 * (1.0 + jax.lax.erf(h1 / math.sqrt(2.0)))
    return x1 + (h1 @ p["w2"].T + p["b2"])


if __name__ == "__main__":
    L, N, E = 8, 2, 32          # seq, batch, emb
    n_heads = 4
    mlp_expansion = 4

    key = jax.random.PRNGKey(0)
    kx, kp = jax.random.split(key)
    x = jax.random.normal(kx, (L, N, E), jnp.float32)
    params = init_params(kp, E, mlp_expansion)

    out = transformer_encoder_block(x, params, n_heads)
    out = jax.block_until_ready(out)

    ref = reference_block(x, params, n_heads)
    # bf16 MXU operands + approx reciprocal -> loosened tolerance vs. f32 reference.
    np.testing.assert_allclose(np.asarray(out), np.asarray(ref), atol=2e-2, rtol=2e-2)

    print("KERNEL_OK")
</pallas_src>

<mosaic_0001>
module attributes {stable_mosaic.version = 11 : i64} {
  func.func @encoder_block_kernel(%arg0: i32, %arg1: i32, %arg2: memref<1x8x32xf32, #tpu.memory_space<vmem>>, %arg3: memref<1x32xf32, #tpu.memory_space<vmem>>, %arg4: memref<1x32xf32, #tpu.memory_space<vmem>>, %arg5: memref<32x32xbf16, #tpu.memory_space<vmem>>, %arg6: memref<1x32xf32, #tpu.memory_space<vmem>>, %arg7: memref<32x32xbf16, #tpu.memory_space<vmem>>, %arg8: memref<1x32xf32, #tpu.memory_space<vmem>>, %arg9: memref<32x32xbf16, #tpu.memory_space<vmem>>, %arg10: memref<1x32xf32, #tpu.memory_space<vmem>>, %arg11: memref<32x32xbf16, #tpu.memory_space<vmem>>, %arg12: memref<1x32xf32, #tpu.memory_space<vmem>>, %arg13: memref<1x32xf32, #tpu.memory_space<vmem>>, %arg14: memref<1x32xf32, #tpu.memory_space<vmem>>, %arg15: memref<32x128xbf16, #tpu.memory_space<vmem>>, %arg16: memref<1x128xf32, #tpu.memory_space<vmem>>, %arg17: memref<128x32xbf16, #tpu.memory_space<vmem>>, %arg18: memref<1x32xf32, #tpu.memory_space<vmem>>, %arg19: memref<1x8x32xf32, #tpu.memory_space<vmem>>, %arg20: memref<8x32xf32, #tpu.memory_space<vmem>>, %arg21: memref<8x32xf32, #tpu.memory_space<vmem>>, %arg22: memref<8x32xf32, #tpu.memory_space<vmem>>) attributes {dimension_semantics = [#tpu.dimension_semantics<parallel>, #tpu.dimension_semantics<arbitrary>], iteration_bounds = array<i64: 2, 1>, scalar_prefetch = 0 : i64, scratch_operands = 3 : i64, tpu.core_type = #tpu.core_type<tc>, window_params = [{transform_indices = @transform_0, window_bounds = array<i64: 1, 8, 32>}, {pipeline_mode = #tpu.pipeline_mode<synchronous>, transform_indices = @transform_1, window_bounds = array<i64: 1, 32>}, {pipeline_mode = #tpu.pipeline_mode<synchronous>, transform_indices = @transform_2, window_bounds = array<i64: 1, 32>}, {pipeline_mode = #tpu.pipeline_mode<synchronous>, transform_indices = @transform_3, window_bounds = array<i64: 32, 32>}, {pipeline_mode = #tpu.pipeline_mode<synchronous>, transform_indices = @transform_4, window_bounds = array<i64: 1, 32>}, {pipeline_mode = #tpu.pipeline_mode<synchronous>, transform_indices = @transform_5, window_bounds = array<i64: 32, 32>}, {pipeline_mode = #tpu.pipeline_mode<synchronous>, transform_indices = @transform_6, window_bounds = array<i64: 1, 32>}, {pipeline_mode = #tpu.pipeline_mode<synchronous>, transform_indices = @transform_7, window_bounds = array<i64: 32, 32>}, {pipeline_mode = #tpu.pipeline_mode<synchronous>, transform_indices = @transform_8, window_bounds = array<i64: 1, 32>}, {pipeline_mode = #tpu.pipeline_mode<synchronous>, transform_indices = @transform_9, window_bounds = array<i64: 32, 32>}, {pipeline_mode = #tpu.pipeline_mode<synchronous>, transform_indices = @transform_10, window_bounds = array<i64: 1, 32>}, {pipeline_mode = #tpu.pipeline_mode<synchronous>, transform_indices = @transform_11, window_bounds = array<i64: 1, 32>}, {pipeline_mode = #tpu.pipeline_mode<synchronous>, transform_indices = @transform_12, window_bounds = array<i64: 1, 32>}, {transform_indices = @transform_13, window_bounds = array<i64: 32, 128>}, {transform_indices = @transform_14, window_bounds = array<i64: 1, 128>}, {transform_indices = @transform_15, window_bounds = array<i64: 128, 32>}, {pipeline_mode = #tpu.pipeline_mode<synchronous>, transform_indices = @transform_16, window_bounds = array<i64: 1, 32>}, {transform_indices = @transform_17, window_bounds = array<i64: 1, 8, 32>}]} {
    %c0_i32 = arith.constant 0 : i32
    %0 = arith.cmpi eq, %arg1, %c0_i32 : i32
    %1 = arith.extui %0 : i1 to i32
    %c0_i32_0 = arith.constant 0 : i32
    %2 = arith.cmpi ne, %1, %c0_i32_0 : i32
    scf.if %2 {
      %c0_18 = arith.constant 0 : index
      %c0_19 = arith.constant 0 : index
      %c0_20 = arith.constant 0 : index
      %27 = vector.load %arg2[%c0_18, %c0_19, %c0_20] : memref<1x8x32xf32, #tpu.memory_space<vmem>>, vector<1x8x32xf32>
      %28 = vector.shape_cast %27 : vector<1x8x32xf32> to vector<8x32xf32>
      %c0_21 = arith.constant 0 : index
      %c0_22 = arith.constant 0 : index
      %29 = vector.load %arg3[%c0_21, %c0_22] : memref<1x32xf32, #tpu.memory_space<vmem>>, vector<1x32xf32>
      %c0_23 = arith.constant 0 : index
      %c0_24 = arith.constant 0 : index
      %30 = vector.load %arg4[%c0_23, %c0_24] : memref<1x32xf32, #tpu.memory_space<vmem>>, vector<1x32xf32>
      %cst_25 = arith.constant dense<0.000000e+00> : vector<8xf32>
      %31 = vector.multi_reduction <add>, %28, %cst_25 [1] : vector<8x32xf32> to vector<8xf32>
      %32 = vector.shape_cast %31 : vector<8xf32> to vector<8x1xf32>
      %cst_26 = arith.constant 3.200000e+01 : f32
      %33 = vector.broadcast %cst_26 : f32 to vector<8x1xf32>
      %34 = arith.divf %32, %33 : vector<8x1xf32>
      %35 = vector.broadcast %34 : vector<8x1xf32> to vector<8x32xf32>
      %36 = arith.subf %28, %35 : vector<8x32xf32>
      %37 = arith.mulf %36, %36 : vector<8x32xf32>
      %cst_27 = arith.constant dense<0.000000e+00> : vector<8xf32>
      %38 = vector.multi_reduction <add>, %37, %cst_27 [1] : vector<8x32xf32> to vector<8xf32>
      %39 = vector.shape_cast %38 : vector<8xf32> to vector<8x1xf32>
      %cst_28 = arith.constant 3.200000e+01 : f32
      %40 = vector.broadcast %cst_28 : f32 to vector<8x1xf32>
      %41 = arith.divf %39, %40 : vector<8x1xf32>
      %42 = vector.broadcast %34 : vector<8x1xf32> to vector<8x32xf32>
      %43 = arith.subf %28, %42 : vector<8x32xf32>
      %cst_29 = arith.constant 9.99999974E-6 : f32
      %44 = vector.broadcast %cst_29 : f32 to vector<8x1xf32>
      %45 = arith.addf %41, %44 : vector<8x1xf32>
      %46 = math.rsqrt %45 : vector<8x1xf32>
      %47 = vector.broadcast %46 : vector<8x1xf32> to vector<8x32xf32>
      %48 = arith.mulf %43, %47 : vector<8x32xf32>
      %49 = vector.broadcast %29 : vector<1x32xf32> to vector<8x32xf32>
      %50 = arith.mulf %48, %49 : vector<8x32xf32>
      %51 = vector.broadcast %30 : vector<1x32xf32> to vector<8x32xf32>
      %52 = arith.addf %50, %51 : vector<8x32xf32>
      %53 = arith.truncf %52 : vector<8x32xf32> to vector<8x32xbf16>
      %c0_30 = arith.constant 0 : index
      %c0_31 = arith.constant 0 : index
      %54 = vector.load %arg5[%c0_30, %c0_31] : memref<32x32xbf16, #tpu.memory_space<vmem>>, vector<32x32xbf16>
      %cst_32 = arith.constant dense<0.000000e+00> : vector<8x32xf32>
      %55 = tpu.matmul %53, %54, %cst_32 {dimension_numbers = #tpu.dot_dimension_numbers<[1], [0], [0], [1], [0, 0, 1, 1], [], []>} : vector<8x32xbf16>, vector<32x32xbf16>, vector<8x32xf32> -> vector<8x32xf32>
      %c0_33 = arith.constant 0 : index
      %c0_34 = arith.constant 0 : index
      %56 = vector.load %arg6[%c0_33, %c0_34] : memref<1x32xf32, #tpu.memory_space<vmem>>, vector<1x32xf32>
      %57 = vector.broadcast %56 : vector<1x32xf32> to vector<8x32xf32>
      %58 = arith.addf %55, %57 : vector<8x32xf32>
      %c0_35 = arith.constant 0 : index
      %c0_36 = arith.constant 0 : index
      %59 = vector.load %arg7[%c0_35, %c0_36] : memref<32x32xbf16, #tpu.memory_space<vmem>>, vector<32x32xbf16>
      %cst_37 = arith.constant dense<0.000000e+00> : vector<8x32xf32>
      %60 = tpu.matmul %53, %59, %cst_37 {dimension_numbers = #tpu.dot_dimension_numbers<[1], [0], [0], [1], [0, 0, 1, 1], [], []>} : vector<8x32xbf16>, vector<32x32xbf16>, vector<8x32xf32> -> vector<8x32xf32>
      %c0_38 = arith.constant 0 : index
      %c0_39 = arith.constant 0 : index
      %61 = vector.load %arg8[%c0_38, %c0_39] : memref<1x32xf32, #tpu.memory_space<vmem>>, vector<1x32xf32>
      %62 = vector.broadcast %61 : vector<1x32xf32> to vector<8x32xf32>
      %63 = arith.addf %60, %62 : vector<8x32xf32>
      %c0_40 = arith.constant 0 : index
      %c0_41 = arith.constant 0 : index
      %64 = vector.load %arg9[%c0_40, %c0_41] : memref<32x32xbf16, #tpu.memory_space<vmem>>, vector<32x32xbf16>
      %cst_42 = arith.constant dense<0.000000e+00> : vector<8x32xf32>
      %65 = tpu.matmul %53, %64, %cst_42 {dimension_numbers = #tpu.dot_dimension_numbers<[1], [0], [0], [1], [0, 0, 1, 1], [], []>} : vector<8x32xbf16>, vector<32x32xbf16>, vector<8x32xf32> -> vector<8x32xf32>
      %c0_43 = arith.constant 0 : index
      %c0_44 = arith.constant 0 : index
      %66 = vector.load %arg10[%c0_43, %c0_44] : memref<1x32xf32, #tpu.memory_space<vmem>>, vector<1x32xf32>
      %67 = vector.broadcast %66 : vector<1x32xf32> to vector<8x32xf32>
      %68 = arith.addf %65, %67 : vector<8x32xf32>
      %69 = vector.shape_cast %58 : vector<8x32xf32> to vector<1x8x32xf32>
      %70 = arith.truncf %69 : vector<1x8x32xf32> to vector<1x8x32xbf16>
      %71 = vector.shape_cast %63 : vector<8x32xf32> to vector<1x8x32xf32>
      %72 = arith.truncf %71 : vector<1x8x32xf32> to vector<1x8x32xbf16>
      %73 = vector.shape_cast %68 : vector<8x32xf32> to vector<1x8x32xf32>
      %74 = arith.truncf %73 : vector<1x8x32xf32> to vector<1x8x32xbf16>
      %c0_45 = arith.constant 0 : index
      %c0_46 = arith.constant 0 : index
      %75 = vector.load %arg11[%c0_45, %c0_46] : memref<32x32xbf16, #tpu.memory_space<vmem>>, vector<32x32xbf16>
      %cst_47 = arith.constant 0.000000e+00 : f32
      %76 = vector.broadcast %cst_47 : f32 to vector<8x32xf32>
      %77 = vector.extract_strided_slice %70 {offsets = [0, 0, 0], sizes = [1, 8, 8], strides = [1, 1, 1]} : vector<1x8x32xbf16> to vector<1x8x8xbf16>
      %78 = vector.extract_strided_slice %72 {offsets = [0, 0, 0], sizes = [1, 8, 8], strides = [1, 1, 1]} : vector<1x8x32xbf16> to vector<1x8x8xbf16>
      "tpu.trace_start"() <{level = 10 : i32, message = "bld,bmd->blm"}> : () -> ()
      %cst_48 = arith.constant dense<0.000000e+00> : vector<1x8x8xf32>
      %79 = tpu.matmul %77, %78, %cst_48 {dimension_numbers = #tpu.dot_dimension_numbers<[2], [2], [1], [1], [0, 0, 0, 1, 1, 1], [0], [0]>} : vector<1x8x8xbf16>, vector<1x8x8xbf16>, vector<1x8x8xf32> -> vector<1x8x8xf32>
      "tpu.trace_stop"() : () -> ()
      %cst_49 = arith.constant dense<0xFF800000> : vector<1x8xf32>
      %80 = vector.multi_reduction <maximumf>, %79, %cst_49 [2] : vector<1x8x8xf32> to vector<1x8xf32>
      %81 = vector.shape_cast %80 : vector<1x8xf32> to vector<1x8x1xf32>
      %82 = vector.broadcast %81 : vector<1x8x1xf32> to vector<1x8x8xf32>
      %83 = arith.subf %79, %82 : vector<1x8x8xf32>
      %84 = math.exp %83 : vector<1x8x8xf32>
      %cst_50 = arith.constant dense<0.000000e+00> : vector<1x8xf32>
      %85 = vector.multi_reduction <add>, %84, %cst_50 [2] : vector<1x8x8xf32> to vector<1x8xf32>
      %86 = vector.shape_cast %85 : vector<1x8xf32> to vector<1x8x1xf32>
      %87 = tpu.reciprocal %86 {approx = true} : vector<1x8x1xf32> -> vector<1x8x1xf32>
      %88 = vector.broadcast %87 : vector<1x8x1xf32> to vector<1x8x8xf32>
      %89 = arith.mulf %84, %88 : vector<1x8x8xf32>
      %90 = arith.truncf %89 : vector<1x8x8xf32> to vector<1x8x8xbf16>
      %91 = vector.extract_strided_slice %74 {offsets = [0, 0, 0], sizes = [1, 8, 8], strides = [1, 1, 1]} : vector<1x8x32xbf16> to vector<1x8x8xbf16>
      "tpu.trace_start"() <{level = 10 : i32, message = "blm,bmd->bld"}> : () -> ()
      %cst_51 = arith.constant dense<0.000000e+00> : vector<1x8x8xf32>
      %92 = tpu.matmul %90, %91, %cst_51 {dimension_numbers = #tpu.dot_dimension_numbers<[2], [1], [1], [2], [0, 0, 0, 1, 1, 2], [0], [0]>} : vector<1x8x8xbf16>, vector<1x8x8xbf16>, vector<1x8x8xf32> -> vector<1x8x8xf32>
      "tpu.trace_stop"() : () -> ()
      %93 = vector.shape_cast %92 : vector<1x8x8xf32> to vector<8x8xf32>
      %94 = arith.truncf %93 : vector<8x8xf32> to vector<8x8xbf16>
      %95 = vector.extract_strided_slice %75 {offsets = [0, 0], sizes = [8, 32], strides = [1, 1]} : vector<32x32xbf16> to vector<8x32xbf16>
      %cst_52 = arith.constant dense<0.000000e+00> : vector<8x32xf32>
      %96 = tpu.matmul %94, %95, %cst_52 {dimension_numbers = #tpu.dot_dimension_numbers<[1], [0], [0], [1], [0, 0, 1, 1], [], []>} : vector<8x8xbf16>, vector<8x32xbf16>, vector<8x32xf32> -> vector<8x32xf32>
      %97 = arith.addf %76, %96 : vector<8x32xf32>
      %98 = vector.extract_strided_slice %70 {offsets = [0, 0, 8], sizes = [1, 8, 8], strides = [1, 1, 1]} : vector<1x8x32xbf16> to vector<1x8x8xbf16>
      %99 = vector.extract_strided_slice %72 {offsets = [0, 0, 8], sizes = [1, 8, 8], strides = [1, 1, 1]} : vector<1x8x32xbf16> to vector<1x8x8xbf16>
      "tpu.trace_start"() <{level = 10 : i32, message = "bld,bmd->blm"}> : () -> ()
      %cst_53 = arith.constant dense<0.000000e+00> : vector<1x8x8xf32>
      %100 = tpu.matmul %98, %99, %cst_53 {dimension_numbers = #tpu.dot_dimension_numbers<[2], [2], [1], [1], [0, 0, 0, 1, 1, 1], [0], [0]>} : vector<1x8x8xbf16>, vector<1x8x8xbf16>, vector<1x8x8xf32> -> vector<1x8x8xf32>
      "tpu.trace_stop"() : () -> ()
      %cst_54 = arith.constant dense<0xFF800000> : vector<1x8xf32>
      %101 = vector.multi_reduction <maximumf>, %100, %cst_54 [2] : vector<1x8x8xf32> to vector<1x8xf32>
      %102 = vector.shape_cast %101 : vector<1x8xf32> to vector<1x8x1xf32>
      %103 = vector.broadcast %102 : vector<1x8x1xf32> to vector<1x8x8xf32>
      %104 = arith.subf %100, %103 : vector<1x8x8xf32>
      %105 = math.exp %104 : vector<1x8x8xf32>
      %cst_55 = arith.constant dense<0.000000e+00> : vector<1x8xf32>
      %106 = vector.multi_reduction <add>, %105, %cst_55 [2] : vector<1x8x8xf32> to vector<1x8xf32>
      %107 = vector.shape_cast %106 : vector<1x8xf32> to vector<1x8x1xf32>
      %108 = tpu.reciprocal %107 {approx = true} : vector<1x8x1xf32> -> vector<1x8x1xf32>
      %109 = vector.broadcast %108 : vector<1x8x1xf32> to vector<1x8x8xf32>
      %110 = arith.mulf %105, %109 : vector<1x8x8xf32>
      %111 = arith.truncf %110 : vector<1x8x8xf32> to vector<1x8x8xbf16>
      %112 = vector.extract_strided_slice %74 {offsets = [0, 0, 8], sizes = [1, 8, 8], strides = [1, 1, 1]} : vector<1x8x32xbf16> to vector<1x8x8xbf16>
      "tpu.trace_start"() <{level = 10 : i32, message = "blm,bmd->bld"}> : () -> ()
      %cst_56 = arith.constant dense<0.000000e+00> : vector<1x8x8xf32>
      %113 = tpu.matmul %111, %112, %cst_56 {dimension_numbers = #tpu.dot_dimension_numbers<[2], [1], [1], [2], [0, 0, 0, 1, 1, 2], [0], [0]>} : vector<1x8x8xbf16>, vector<1x8x8xbf16>, vector<1x8x8xf32> -> vector<1x8x8xf32>
      "tpu.trace_stop"() : () -> ()
      %114 = vector.shape_cast %113 : vector<1x8x8xf32> to vector<8x8xf32>
      %115 = arith.truncf %114 : vector<8x8xf32> to vector<8x8xbf16>
      %116 = vector.extract_strided_slice %75 {offsets = [8, 0], sizes = [8, 32], strides = [1, 1]} : vector<32x32xbf16> to vector<8x32xbf16>
      %cst_57 = arith.constant dense<0.000000e+00> : vector<8x32xf32>
      %117 = tpu.matmul %115, %116, %cst_57 {dimension_numbers = #tpu.dot_dimension_numbers<[1], [0], [0], [1], [0, 0, 1, 1], [], []>} : vector<8x8xbf16>, vector<8x32xbf16>, vector<8x32xf32> -> vector<8x32xf32>
      %118 = arith.addf %97, %117 : vector<8x32xf32>
      %119 = vector.extract_strided_slice %70 {offsets = [0, 0, 16], sizes = [1, 8, 8], strides = [1, 1, 1]} : vector<1x8x32xbf16> to vector<1x8x8xbf16>
      %120 = vector.extract_strided_slice %72 {offsets = [0, 0, 16], sizes = [1, 8, 8], strides = [1, 1, 1]} : vector<1x8x32xbf16> to vector<1x8x8xbf16>
      "tpu.trace_start"() <{level = 10 : i32, message = "bld,bmd->blm"}> : () -> ()
      %cst_58 = arith.constant dense<0.000000e+00> : vector<1x8x8xf32>
      %121 = tpu.matmul %119, %120, %cst_58 {dimension_numbers = #tpu.dot_dimension_numbers<[2], [2], [1], [1], [0, 0, 0, 1, 1, 1], [0], [0]>} : vector<1x8x8xbf16>, vector<1x8x8xbf16>, vector<1x8x8xf32> -> vector<1x8x8xf32>
      "tpu.trace_stop"() : () -> ()
      %cst_59 = arith.constant dense<0xFF800000> : vector<1x8xf32>
      %122 = vector.multi_reduction <maximumf>, %121, %cst_59 [2] : vector<1x8x8xf32> to vector<1x8xf32>
      %123 = vector.shape_cast %122 : vector<1x8xf32> to vector<1x8x1xf32>
      %124 = vector.broadcast %123 : vector<1x8x1xf32> to vector<1x8x8xf32>
      %125 = arith.subf %121, %124 : vector<1x8x8xf32>
      %126 = math.exp %125 : vector<1x8x8xf32>
      %cst_60 = arith.constant dense<0.000000e+00> : vector<1x8xf32>
      %127 = vector.multi_reduction <add>, %126, %cst_60 [2] : vector<1x8x8xf32> to vector<1x8xf32>
      %128 = vector.shape_cast %127 : vector<1x8xf32> to vector<1x8x1xf32>
      %129 = tpu.reciprocal %128 {approx = true} : vector<1x8x1xf32> -> vector<1x8x1xf32>
      %130 = vector.broadcast %129 : vector<1x8x1xf32> to vector<1x8x8xf32>
      %131 = arith.mulf %126, %130 : vector<1x8x8xf32>
      %132 = arith.truncf %131 : vector<1x8x8xf32> to vector<1x8x8xbf16>
      %133 = vector.extract_strided_slice %74 {offsets = [0, 0, 16], sizes = [1, 8, 8], strides = [1, 1, 1]} : vector<1x8x32xbf16> to vector<1x8x8xbf16>
      "tpu.trace_start"() <{level = 10 : i32, message = "blm,bmd->bld"}> : () -> ()
      %cst_61 = arith.constant dense<0.000000e+00> : vector<1x8x8xf32>
      %134 = tpu.matmul %132, %133, %cst_61 {dimension_numbers = #tpu.dot_dimension_numbers<[2], [1], [1], [2], [0, 0, 0, 1, 1, 2], [0], [0]>} : vector<1x8x8xbf16>, vector<1x8x8xbf16>, vector<1x8x8xf32> -> vector<1x8x8xf32>
      "tpu.trace_stop"() : () -> ()
      %135 = vector.shape_cast %134 : vector<1x8x8xf32> to vector<8x8xf32>
      %136 = arith.truncf %135 : vector<8x8xf32> to vector<8x8xbf16>
      %137 = vector.extract_strided_slice %75 {offsets = [16, 0], sizes = [8, 32], strides = [1, 1]} : vector<32x32xbf16> to vector<8x32xbf16>
      %cst_62 = arith.constant dense<0.000000e+00> : vector<8x32xf32>
      %138 = tpu.matmul %136, %137, %cst_62 {dimension_numbers = #tpu.dot_dimension_numbers<[1], [0], [0], [1], [0, 0, 1, 1], [], []>} : vector<8x8xbf16>, vector<8x32xbf16>, vector<8x32xf32> -> vector<8x32xf32>
      %139 = arith.addf %118, %138 : vector<8x32xf32>
      %140 = vector.extract_strided_slice %70 {offsets = [0, 0, 24], sizes = [1, 8, 8], strides = [1, 1, 1]} : vector<1x8x32xbf16> to vector<1x8x8xbf16>
      %141 = vector.extract_strided_slice %72 {offsets = [0, 0, 24], sizes = [1, 8, 8], strides = [1, 1, 1]} : vector<1x8x32xbf16> to vector<1x8x8xbf16>
      "tpu.trace_start"() <{level = 10 : i32, message = "bld,bmd->blm"}> : () -> ()
      %cst_63 = arith.constant dense<0.000000e+00> : vector<1x8x8xf32>
      %142 = tpu.matmul %140, %141, %cst_63 {dimension_numbers = #tpu.dot_dimension_numbers<[2], [2], [1], [1], [0, 0, 0, 1, 1, 1], [0], [0]>} : vector<1x8x8xbf16>, vector<1x8x8xbf16>, vector<1x8x8xf32> -> vector<1x8x8xf32>
      "tpu.trace_stop"() : () -> ()
      %cst_64 = arith.constant dense<0xFF800000> : vector<1x8xf32>
      %143 = vector.multi_reduction <maximumf>, %142, %cst_64 [2] : vector<1x8x8xf32> to vector<1x8xf32>
      %144 = vector.shape_cast %143 : vector<1x8xf32> to vector<1x8x1xf32>
      %145 = vector.broadcast %144 : vector<1x8x1xf32> to vector<1x8x8xf32>
      %146 = arith.subf %142, %145 : vector<1x8x8xf32>
      %147 = math.exp %146 : vector<1x8x8xf32>
      %cst_65 = arith.constant dense<0.000000e+00> : vector<1x8xf32>
      %148 = vector.multi_reduction <add>, %147, %cst_65 [2] : vector<1x8x8xf32> to vector<1x8xf32>
      %149 = vector.shape_cast %148 : vector<1x8xf32> to vector<1x8x1xf32>
      %150 = tpu.reciprocal %149 {approx = true} : vector<1x8x1xf32> -> vector<1x8x1xf32>
      %151 = vector.broadcast %150 : vector<1x8x1xf32> to vector<1x8x8xf32>
      %152 = arith.mulf %147, %151 : vector<1x8x8xf32>
      %153 = arith.truncf %152 : vector<1x8x8xf32> to vector<1x8x8xbf16>
      %154 = vector.extract_strided_slice %74 {offsets = [0, 0, 24], sizes = [1, 8, 8], strides = [1, 1, 1]} : vector<1x8x32xbf16> to vector<1x8x8xbf16>
      "tpu.trace_start"() <{level = 10 : i32, message = "blm,bmd->bld"}> : () -> ()
      %cst_66 = arith.constant dense<0.000000e+00> : vector<1x8x8xf32>
      %155 = tpu.matmul %153, %154, %cst_66 {dimension_numbers = #tpu.dot_dimension_numbers<[2], [1], [1], [2], [0, 0, 0, 1, 1, 2], [0], [0]>} : vector<1x8x8xbf16>, vector<1x8x8xbf16>, vector<1x8x8xf32> -> vector<1x8x8xf32>
      "tpu.trace_stop"() : () -> ()
      %156 = vector.shape_cast %155 : vector<1x8x8xf32> to vector<8x8xf32>
      %157 = arith.truncf %156 : vector<8x8xf32> to vector<8x8xbf16>
      %158 = vector.extract_strided_slice %75 {offsets = [24, 0], sizes = [8, 32], strides = [1, 1]} : vector<32x32xbf16> to vector<8x32xbf16>
      %cst_67 = arith.constant dense<0.000000e+00> : vector<8x32xf32>
      %159 = tpu.matmul %157, %158, %cst_67 {dimension_numbers = #tpu.dot_dimension_numbers<[1], [0], [0], [1], [0, 0, 1, 1], [], []>} : vector<8x8xbf16>, vector<8x32xbf16>, vector<8x32xf32> -> vector<8x32xf32>
      %160 = arith.addf %139, %159 : vector<8x32xf32>
      %161 = arith.addf %28, %160 : vector<8x32xf32>
      %c0_68 = arith.constant 0 : index
      %c0_69 = arith.constant 0 : index
      %162 = vector.load %arg12[%c0_68, %c0_69] : memref<1x32xf32, #tpu.memory_space<vmem>>, vector<1x32xf32>
      %163 = vector.broadcast %162 : vector<1x32xf32> to vector<8x32xf32>
      %164 = arith.addf %161, %163 : vector<8x32xf32>
      %c0_70 = arith.constant 0 : index
      %c0_71 = arith.constant 0 : index
      %165 = vector.load %arg20[%c0_70, %c0_71] : memref<8x32xf32, #tpu.memory_space<vmem>>, vector<8x32xf32>
      tpu.vector_store %arg20[%c0_70, %c0_71], %164 {strides = array<i32>} : memref<8x32xf32, #tpu.memory_space<vmem>>, vector<8x32xf32>,
      %c0_72 = arith.constant 0 : index
      %c0_73 = arith.constant 0 : index
      %166 = vector.load %arg13[%c0_72, %c0_73] : memref<1x32xf32, #tpu.memory_space<vmem>>, vector<1x32xf32>
      %c0_74 = arith.constant 0 : index
      %c0_75 = arith.constant 0 : index
      %167 = vector.load %arg14[%c0_74, %c0_75] : memref<1x32xf32, #tpu.memory_space<vmem>>, vector<1x32xf32>
      %cst_76 = arith.constant dense<0.000000e+00> : vector<8xf32>
      %168 = vector.multi_reduction <add>, %164, %cst_76 [1] : vector<8x32xf32> to vector<8xf32>
      %169 = vector.shape_cast %168 : vector<8xf32> to vector<8x1xf32>
      %cst_77 = arith.constant 3.200000e+01 : f32
      %170 = vector.broadcast %cst_77 : f32 to vector<8x1xf32>
      %171 = arith.divf %169, %170 : vector<8x1xf32>
      %172 = vector.broadcast %171 : vector<8x1xf32> to vector<8x32xf32>
      %173 = arith.subf %164, %172 : vector<8x32xf32>
      %174 = arith.mulf %173, %173 : vector<8x32xf32>
      %cst_78 = arith.constant dense<0.000000e+00> : vector<8xf32>
      %175 = vector.multi_reduction <add>, %174, %cst_78 [1] : vector<8x32xf32> to vector<8xf32>
      %176 = vector.shape_cast %175 : vector<8xf32> to vector<8x1xf32>
      %cst_79 = arith.constant 3.200000e+01 : f32
      %177 = vector.broadcast %cst_79 : f32 to vector<8x1xf32>
      %178 = arith.divf %176, %177 : vector<8x1xf32>
      %179 = vector.broadcast %171 : vector<8x1xf32> to vector<8x32xf32>
      %180 = arith.subf %164, %179 : vector<8x32xf32>
      %cst_80 = arith.constant 9.99999974E-6 : f32
      %181 = vector.broadcast %cst_80 : f32 to vector<8x1xf32>
      %182 = arith.addf %178, %181 : vector<8x1xf32>
      %183 = math.rsqrt %182 : vector<8x1xf32>
      %184 = vector.broadcast %183 : vector<8x1xf32> to vector<8x32xf32>
      %185 = arith.mulf %180, %184 : vector<8x32xf32>
      %186 = vector.broadcast %166 : vector<1x32xf32> to vector<8x32xf32>
      %187 = arith.mulf %185, %186 : vector<8x32xf32>
      %188 = vector.broadcast %167 : vector<1x32xf32> to vector<8x32xf32>
      %189 = arith.addf %187, %188 : vector<8x32xf32>
      %c0_81 = arith.constant 0 : index
      %c0_82 = arith.constant 0 : index
      %190 = vector.load %arg21[%c0_81, %c0_82] : memref<8x32xf32, #tpu.memory_space<vmem>>, vector<8x32xf32>
      tpu.vector_store %arg21[%c0_81, %c0_82], %189 {strides = array<i32>} : memref<8x32xf32, #tpu.memory_space<vmem>>, vector<8x32xf32>,
      %cst_83 = arith.constant 0.000000e+00 : f32
      %191 = vector.broadcast %cst_83 : f32 to vector<8x32xf32>
      %c0_84 = arith.constant 0 : index
      %c0_85 = arith.constant 0 : index
      %192 = vector.load %arg22[%c0_84, %c0_85] : memref<8x32xf32, #tpu.memory_space<vmem>>, vector<8x32xf32>
      tpu.vector_store %arg22[%c0_84, %c0_85], %191 {strides = array<i32>} : memref<8x32xf32, #tpu.memory_space<vmem>>, vector<8x32xf32>,
    } else {
    }
    %c0 = arith.constant 0 : index
    %c0_1 = arith.constant 0 : index
    %3 = vector.load %arg21[%c0, %c0_1] : memref<8x32xf32, #tpu.memory_space<vmem>>, vector<8x32xf32>
    %4 = arith.truncf %3 : vector<8x32xf32> to vector<8x32xbf16>
    %c0_2 = arith.constant 0 : index
    %c0_3 = arith.constant 0 : index
    %5 = vector.load %arg15[%c0_2, %c0_3] : memref<32x128xbf16, #tpu.memory_space<vmem>>, vector<32x128xbf16>
    %cst = arith.constant dense<0.000000e+00> : vector<8x128xf32>
    %6 = tpu.matmul %4, %5, %cst {dimension_numbers = #tpu.dot_dimension_numbers<[1], [0], [0], [1], [0, 0, 1, 1], [], []>} : vector<8x32xbf16>, vector<32x128xbf16>, vector<8x128xf32> -> vector<8x128xf32>
    %c0_4 = arith.constant 0 : index
    %c0_5 = arith.constant 0 : index
    %7 = vector.load %arg16[%c0_4, %c0_5] : memref<1x128xf32, #tpu.memory_space<vmem>>, vector<1x128xf32>
    %8 = vector.broadcast %7 : vector<1x128xf32> to vector<8x128xf32>
    %9 = arith.addf %6, %8 : vector<8x128xf32>
    %cst_6 = arith.constant 5.000000e-01 : f32
    %10 = vector.broadcast %cst_6 : f32 to vector<8x128xf32>
    %11 = arith.mulf %10, %9 : vector<8x128xf32>
    %cst_7 = arith.constant 0.707106769 : f32
    %12 = vector.broadcast %cst_7 : f32 to vector<8x128xf32>
    %13 = arith.mulf %9, %12 : vector<8x128xf32>
    %14 = math.erf %13 : vector<8x128xf32>
    %cst_8 = arith.constant 1.000000e+00 : f32
    %15 = vector.broadcast %cst_8 : f32 to vector<8x128xf32>
    %16 = arith.addf %15, %14 : vector<8x128xf32>
    %17 = arith.mulf %11, %16 : vector<8x128xf32>
    %c0_9 = arith.constant 0 : index
    %c0_10 = arith.constant 0 : index
    %18 = vector.load %arg22[%c0_9, %c0_10] : memref<8x32xf32, #tpu.memory_space<vmem>>, vector<8x32xf32>
    %19 = arith.truncf %17 : vector<8x128xf32> to vector<8x128xbf16>
    %c0_11 = arith.constant 0 : index
    %c0_12 = arith.constant 0 : index
    %20 = vector.load %arg17[%c0_11, %c0_12] : memref<128x32xbf16, #tpu.memory_space<vmem>>, vector<128x32xbf16>
    %cst_13 = arith.constant dense<0.000000e+00> : vector<8x32xf32>
    %21 = tpu.matmul %19, %20, %cst_13 {dimension_numbers = #tpu.dot_dimension_numbers<[1], [0], [0], [1], [0, 0, 1, 1], [], []>} : vector<8x128xbf16>, vector<128x32xbf16>, vector<8x32xf32> -> vector<8x32xf32>
    %22 = arith.addf %18, %21 : vector<8x32xf32>
    %c0_14 = arith.constant 0 : index
    %c0_15 = arith.constant 0 : index
    %23 = vector.load %arg22[%c0_14, %c0_15] : memref<8x32xf32, #tpu.memory_space<vmem>>, vector<8x32xf32>
    tpu.vector_store %arg22[%c0_14, %c0_15], %22 {strides = array<i32>} : memref<8x32xf32, #tpu.memory_space<vmem>>, vector<8x32xf32>,
    %c0_i32_16 = arith.constant 0 : i32
    %24 = arith.cmpi eq, %arg1, %c0_i32_16 : i32
    %25 = arith.extui %24 : i1 to i32
    %c0_i32_17 = arith.constant 0 : i32
    %26 = arith.cmpi ne, %25, %c0_i32_17 : i32
    scf.if %26 {
      %c0_18 = arith.constant 0 : index
      %c0_19 = arith.constant 0 : index
      %27 = vector.load %arg20[%c0_18, %c0_19] : memref<8x32xf32, #tpu.memory_space<vmem>>, vector<8x32xf32>
      %c0_20 = arith.constant 0 : index
      %c0_21 = arith.constant 0 : index
      %28 = vector.load %arg22[%c0_20, %c0_21] : memref<8x32xf32, #tpu.memory_space<vmem>>, vector<8x32xf32>
      %29 = arith.addf %27, %28 : vector<8x32xf32>
      %c0_22 = arith.constant 0 : index
      %c0_23 = arith.constant 0 : index
      %30 = vector.load %arg18[%c0_22, %c0_23] : memref<1x32xf32, #tpu.memory_space<vmem>>, vector<1x32xf32>
      %31 = vector.broadcast %30 : vector<1x32xf32> to vector<8x32xf32>
      %32 = arith.addf %29, %31 : vector<8x32xf32>
      %33 = vector.shape_cast %32 : vector<8x32xf32> to vector<1x8x32xf32>
      %c0_24 = arith.constant 0 : index
      %c0_25 = arith.constant 0 : index
      %c0_26 = arith.constant 0 : index
      %34 = vector.load %arg19[%c0_24, %c0_25, %c0_26] : memref<1x8x32xf32, #tpu.memory_space<vmem>>, vector<1x8x32xf32>
      tpu.vector_store %arg19[%c0_24, %c0_25, %c0_26], %33 {strides = array<i32>} : memref<1x8x32xf32, #tpu.memory_space<vmem>>, vector<1x8x32xf32>,
    } else {
    }
    return
  }
  func.func @transform_0(%arg0: i32, %arg1: i32) -> (i32, i32, i32) {
    %c0_i32 = arith.constant 0 : i32
    %c0_i32_0 = arith.constant 0 : i32
    %c0_i32_1 = arith.constant 0 : i32
    return %arg0, %c0_i32, %c0_i32_0 : i32, i32, i32
  }
  func.func @transform_1(%arg0: i32, %arg1: i32) -> (i32, i32) {
    %c0_i32 = arith.constant 0 : i32
    %c0_i32_0 = arith.constant 0 : i32
    %c0_i32_1 = arith.constant 0 : i32
    return %c0_i32, %c0_i32_0 : i32, i32
  }
  func.func @transform_2(%arg0: i32, %arg1: i32) -> (i32, i32) {
    %c0_i32 = arith.constant 0 : i32
    %c0_i32_0 = arith.constant 0 : i32
    %c0_i32_1 = arith.constant 0 : i32
    return %c0_i32, %c0_i32_0 : i32, i32
  }
  func.func @transform_3(%arg0: i32, %arg1: i32) -> (i32, i32) {
    %c0_i32 = arith.constant 0 : i32
    %c0_i32_0 = arith.constant 0 : i32
    %c0_i32_1 = arith.constant 0 : i32
    return %c0_i32, %c0_i32_0 : i32, i32
  }
  func.func @transform_4(%arg0: i32, %arg1: i32) -> (i32, i32) {
    %c0_i32 = arith.constant 0 : i32
    %c0_i32_0 = arith.constant 0 : i32
    %c0_i32_1 = arith.constant 0 : i32
    return %c0_i32, %c0_i32_0 : i32, i32
  }
  func.func @transform_5(%arg0: i32, %arg1: i32) -> (i32, i32) {
    %c0_i32 = arith.constant 0 : i32
    %c0_i32_0 = arith.constant 0 : i32
    %c0_i32_1 = arith.constant 0 : i32
    return %c0_i32, %c0_i32_0 : i32, i32
  }
  func.func @transform_6(%arg0: i32, %arg1: i32) -> (i32, i32) {
    %c0_i32 = arith.constant 0 : i32
    %c0_i32_0 = arith.constant 0 : i32
    %c0_i32_1 = arith.constant 0 : i32
    return %c0_i32, %c0_i32_0 : i32, i32
  }
  func.func @transform_7(%arg0: i32, %arg1: i32) -> (i32, i32) {
    %c0_i32 = arith.constant 0 : i32
    %c0_i32_0 = arith.constant 0 : i32
    %c0_i32_1 = arith.constant 0 : i32
    return %c0_i32, %c0_i32_0 : i32, i32
  }
  func.func @transform_8(%arg0: i32, %arg1: i32) -> (i32, i32) {
    %c0_i32 = arith.constant 0 : i32
    %c0_i32_0 = arith.constant 0 : i32
    %c0_i32_1 = arith.constant 0 : i32
    return %c0_i32, %c0_i32_0 : i32, i32
  }
  func.func @transform_9(%arg0: i32, %arg1: i32) -> (i32, i32) {
    %c0_i32 = arith.constant 0 : i32
    %c0_i32_0 = arith.constant 0 : i32
    %c0_i32_1 = arith.constant 0 : i32
    return %c0_i32, %c0_i32_0 : i32, i32
  }
  func.func @transform_10(%arg0: i32, %arg1: i32) -> (i32, i32) {
    %c0_i32 = arith.constant 0 : i32
    %c0_i32_0 = arith.constant 0 : i32
    %c0_i32_1 = arith.constant 0 : i32
    return %c0_i32, %c0_i32_0 : i32, i32
  }
  func.func @transform_11(%arg0: i32, %arg1: i32) -> (i32, i32) {
    %c0_i32 = arith.constant 0 : i32
    %c0_i32_0 = arith.constant 0 : i32
    %c0_i32_1 = arith.constant 0 : i32
    return %c0_i32, %c0_i32_0 : i32, i32
  }
  func.func @transform_12(%arg0: i32, %arg1: i32) -> (i32, i32) {
    %c0_i32 = arith.constant 0 : i32
    %c0_i32_0 = arith.constant 0 : i32
    %c0_i32_1 = arith.constant 0 : i32
    return %c0_i32, %c0_i32_0 : i32, i32
  }
  func.func @transform_13(%arg0: i32, %arg1: i32) -> (i32, i32) {
    %c0_i32 = arith.constant 0 : i32
    %c0_i32_0 = arith.constant 0 : i32
    return %c0_i32, %arg1 : i32, i32
  }
  func.func @transform_14(%arg0: i32, %arg1: i32) -> (i32, i32) {
    %c0_i32 = arith.constant 0 : i32
    %c0_i32_0 = arith.constant 0 : i32
    return %c0_i32, %arg1 : i32, i32
  }
  func.func @transform_15(%arg0: i32, %arg1: i32) -> (i32, i32) {
    %c0_i32 = arith.constant 0 : i32
    %c0_i32_0 = arith.constant 0 : i32
    return %arg1, %c0_i32 : i32, i32
  }
  func.func @transform_16(%arg0: i32, %arg1: i32) -> (i32, i32) {
    %c0_i32 = arith.constant 0 : i32
    %c0_i32_0 = arith.constant 0 : i32
    %c0_i32_1 = arith.constant 0 : i32
    return %c0_i32, %c0_i32_0 : i32, i32
  }
  func.func @transform_17(%arg0: i32, %arg1: i32) -> (i32, i32, i32) {
    %c0_i32 = arith.constant 0 : i32
    %c0_i32_0 = arith.constant 0 : i32
    %c0_i32_1 = arith.constant 0 : i32
    return %arg0, %c0_i32, %c0_i32_0 : i32, i32, i32
  }
}

</mosaic_0001>

<llo_original>
// kernel: tpu_custom_call.1
$region0: #{tpu_custom_call.1}
  #allocation0 [shape = 'u32[]', space=smem, size = 0x4, offset = 0x4, fixed_abs, tag = 'smem constant byte address 0x4 - core index']
  #allocation1 [shape = 'u32[72,128]{1,0:T(1,128)}', space=vmem, size = 0x9000, scoped, tag = 'internal scratch']
  #allocation2 [shape = 'f32[8,32]{1,0:T(8,128)}', space=vmem, size = 0x1000, scoped, tag = 'scratch operand']
  #allocation3 [shape = 'f32[8,32]{1,0:T(8,128)}', space=vmem, size = 0x1000, scoped, tag = 'scratch operand']
  #allocation4 [shape = 'f32[8,32]{1,0:T(8,128)}', space=vmem, size = 0x1000, scoped, tag = 'scratch operand']
  %s0 = inlined_call_operand.vmem [shape: f32[2,8,32], index: 0, kind: input, shape index: {}]
  %s1 = inlined_call_operand.hbm [shape: f32[1,32], index: 1, kind: input, shape index: {}]
  %s2 = inlined_call_operand.vmem [shape: f32[1,32], index: 2, kind: input, shape index: {}]
  %s3 = inlined_call_operand.vmem [shape: bf16[32,32], index: 3, kind: input, shape index: {}]
  %s4 = inlined_call_operand.vmem [shape: f32[1,32], index: 4, kind: input, shape index: {}]
  %s5 = inlined_call_operand.vmem [shape: bf16[32,32], index: 5, kind: input, shape index: {}]
  %s6 = inlined_call_operand.vmem [shape: f32[1,32], index: 6, kind: input, shape index: {}]
  %s7 = inlined_call_operand.vmem [shape: bf16[32,32], index: 7, kind: input, shape index: {}]
  %s8 = inlined_call_operand.vmem [shape: f32[1,32], index: 8, kind: input, shape index: {}]
  %s9 = inlined_call_operand.vmem [shape: bf16[32,32], index: 9, kind: input, shape index: {}]
  %s10 = inlined_call_operand.vmem [shape: f32[1,32], index: 10, kind: input, shape index: {}]
  %s11 = inlined_call_operand.vmem [shape: f32[1,32], index: 11, kind: input, shape index: {}]
  %s12 = inlined_call_operand.vmem [shape: f32[1,32], index: 12, kind: input, shape index: {}]
  %s13 = inlined_call_operand.hbm [shape: bf16[32,128], index: 13, kind: input, shape index: {}]
  %s14 = inlined_call_operand.vmem [shape: f32[1,128], index: 14, kind: input, shape index: {}]
  %s15 = inlined_call_operand.vmem [shape: bf16[128,32], index: 15, kind: input, shape index: {}]
  %s16 = inlined_call_operand.vmem [shape: f32[1,32], index: 16, kind: input, shape index: {}]
  %s17 = inlined_call_operand.hbm [shape: f32[2,8,32], index: 17, kind: output, shape index: {}]
  %s18 = sld [smem:[#allocation0]]
  $region117: #{tpu_custom_call.1} parent=0
    _
  %s20 = ssub.s32 1, %s18
  %s21 = scalar_select 0, %s20, %s18
  $region1: #{tpu_custom_call.1} parent=0
    #allocation5 [shape = 'u8[512]{0}', space=vmem, size = 0x400, scoped, tag = 'input window, operand 1, single buffered']
    #allocation6 [shape = 's32[2]{0}', space=sflag, size = 0x8, scoped, tag = 'scoped memory for tpu_custom_call.1']
    #allocation7 [shape = 's32[2]{0}', space=sflag, size = 0x8, scoped, tag = 'scoped memory for tpu_custom_call.1']
    #allocation8 [shape = 'u8[8192]{0}', space=vmem, size = 0x2000, scoped, tag = 'input window, operand 13, single buffered']
    #allocation9 [shape = 's32[1]{0}', space=sflag, size = 0x4, scoped, tag = 'scoped memory for tpu_custom_call.1']
    #allocation10 [shape = 'u8[8192]{0}', space=vmem, size = 0x2000, scoped, tag = 'output window, operand 0']
    %22 = vsyncpa [#allocation6], 0
    %23 = vsyncpa [#allocation9], 0
    %24 = vsyncpa [#allocation7], 0
    %s25 = scalar_lea.sflag [#allocation7], 1
    %26 = vsyncpa %s25, 0
    loop: start=0, step=1, limit=4
    $region2: #{tpu_custom_call.1} parent=1 // loop_pre_header
      _
    $region3: #{tpu_custom_call.1} parent=1 // loop_header
      %s28 = sphi 0, %s32
      %p29 = scmp.ge.s32.totalorder %s28, 4
      %s35 = sphi 0, %s47
      %s36 = sphi 0, %s43
      %s37 = sphi 0, %s35
      %s38 = sphi 0, %s36
      %s39 = sphi 0, %s37
      %s40 = sphi 0, %s38
      %s50 = sphi 0, %s52
      %s53 = sphi 0, %s50
      %s54 = sphi 0, %s53
      %s70 = sphi 0, %s54
      %s74 = sphi 0, %s74
      %s76 = sphi 0, %s74
      %s77 = sphi 0, %s76
      %s91 = sphi 0, %s77
      %s95 = sphi 0, %s95
      %s97 = sphi 0, %s95
      %s98 = sphi 0, %s97
      %s112 = sphi 0, %s98
      %s116 = sphi 0, %s116
      %s118 = sphi 0, %s116
      %s119 = sphi 0, %s118
      %s133 = sphi 0, %s119
      %s137 = sphi 0, %s137
      %s139 = sphi 0, %s137
      %s140 = sphi 0, %s139
      %s154 = sphi 0, %s140
      %s158 = sphi 0, %s158
      %s160 = sphi 0, %s158
      %s161 = sphi 0, %s160
      %s175 = sphi 0, %s161
      %s179 = sphi 0, %s179
      %s181 = sphi 0, %s179
      %s182 = sphi 0, %s181
      %s196 = sphi 0, %s182
      %s200 = sphi 0, %s200
      %s202 = sphi 0, %s200
      %s203 = sphi 0, %s202
      %s217 = sphi 0, %s203
      %s221 = sphi 0, %s221
      %s223 = sphi 0, %s221
      %s224 = sphi 0, %s223
      %s238 = sphi 0, %s224
      %s242 = sphi 0, %s242
      %s244 = sphi 0, %s242
      %s245 = sphi 0, %s244
      %s259 = sphi 0, %s245
      %s263 = sphi 0, %s263
      %s265 = sphi 0, %s263
      %s266 = sphi 0, %s265
      %s280 = sphi 0, %s266
      %s284 = sphi 0, %s284
      %s286 = sphi 0, %s284
      %s287 = sphi 0, %s286
      %s301 = sphi 0, %s287
      %s305 = sphi 0, %s305
      %s307 = sphi 0, %s305
      %s308 = sphi 0, %s307
      %s322 = sphi 0, %s308
      %s328 = sphi 0, %s330
      %s331 = sphi 0, %s328
      %s332 = sphi 0, %s331
      %s348 = sphi 0, %s332
      %s354 = sphi 0, %s356
      %s357 = sphi 0, %s354
      %s358 = sphi 0, %s357
      %s374 = sphi 0, %s358
      %s380 = sphi 0, %s382
      %s383 = sphi 0, %s380
      %s384 = sphi 0, %s383
      %s400 = sphi 0, %s384
      %s404 = sphi 0, %s404
      %s406 = sphi 0, %s404
      %s407 = sphi 0, %s406
      %s421 = sphi 0, %s407
      %s427 = sphi 0, %s429
      %s430 = sphi 0, %s427
      %s431 = sphi 0, %s430
      %s447 = sphi 0, %s431
    $region4: #{tpu_custom_call.1} parent=1 // loop_header_branch
      %31 = sbr.rel (%p29) target = $region8
    $region5: #{tpu_custom_call.1} parent=1 // loop_body
      %s33 = ssub.s32 %s28, 1
      %s34 = ssub.s32 %s28, 2
      %s41 = sadd.s32 1, %s36
      %p42 = scmp.ge.s32.totalorder %s41, 1
      %s43 = scalar_select %p42, 0, %s41
      %s44 = sadd.s32 1, %s35
      %s45 = scalar_select %p42, %s44, %s35
      %p46 = scmp.ge.s32.totalorder %s45, 2
      %s47 = scalar_select %p46, 0, %s45
      %s48 = ssub.s32 %s35, %s47
      %p49 = scmp.eq.s32.totalorder %s48, 0
      %s51 = sadd.s32 %s50, 1
      %s52 = scalar_select %p49, %s50, %s51
      %p55 = pneg %p49
      %p56 = scmp.eq.s32.totalorder %s28, 1
      %p57 = por %p55, %p56
      %p58 = scmp.ne.s32.totalorder %s50, %s53
      %p59 = scmp.eq.s32.totalorder %s28, 0
      %p60 = por %p58, %p59
      %p61 = scmp.ne.s32.totalorder %s50, %s53
      %p62 = scmp.eq.s32.totalorder %s33, 1
      %p63 = por %p61, %p62
      %p64 = scmp.ne.s32.totalorder %s53, %s54
      %p65 = scmp.eq.s32.totalorder %s33, 0
      %p66 = por %p64, %p65
      %p67 = scmp.ne.s32.totalorder %s53, %s54
      %p68 = scmp.eq.s32.totalorder %s34, 1
      %p69 = por %p67, %p68
      %p71 = scmp.ne.s32.totalorder %s54, %s70
      %p72 = scmp.eq.s32.totalorder %s34, 0
      %p73 = por %p71, %p72
      %s75 = sadd.s32 %s74, 1
      %p78 = scmp.eq.s32.totalorder %s28, 1
      %p79 = scmp.ne.s32.totalorder %s74, %s76
      %p80 = scmp.eq.s32.totalorder %s28, 0
      %p81 = por %p79, %p80
      %p82 = scmp.ne.s32.totalorder %s74, %s76
      %p83 = scmp.eq.s32.totalorder %s33, 1
      %p84 = por %p82, %p83
      %p85 = scmp.ne.s32.totalorder %s76, %s77
      %p86 = scmp.eq.s32.totalorder %s33, 0
      %p87 = por %p85, %p86
      %p88 = scmp.ne.s32.totalorder %s76, %s77
      %p89 = scmp.eq.s32.totalorder %s34, 1
      %p90 = por %p88, %p89
      %p92 = scmp.ne.s32.totalorder %s77, %s91
      %p93 = scmp.eq.s32.totalorder %s34, 0
      %p94 = por %p92, %p93
      %s96 = sadd.s32 %s95, 1
      %p99 = scmp.eq.s32.totalorder %s28, 1
      %p100 = scmp.ne.s32.totalorder %s95, %s97
      %p101 = scmp.eq.s32.totalorder %s28, 0
      %p102 = por %p100, %p101
      %p103 = scmp.ne.s32.totalorder %s95, %s97
      %p104 = scmp.eq.s32.totalorder %s33, 1
      %p105 = por %p103, %p104
      %p106 = scmp.ne.s32.totalorder %s97, %s98
      %p107 = scmp.eq.s32.totalorder %s33, 0
      %p108 = por %p106, %p107
      %p109 = scmp.ne.s32.totalorder %s97, %s98
      %p110 = scmp.eq.s32.totalorder %s34, 1
      %p111 = por %p109, %p110
      %p113 = scmp.ne.s32.totalorder %s98, %s112
      %p114 = scmp.eq.s32.totalorder %s34, 0
      %p115 = por %p113, %p114
      %s117 = sadd.s32 %s116, 1
      %p120 = scmp.eq.s32.totalorder %s28, 1
      %p121 = scmp.ne.s32.totalorder %s116, %s118
      %p122 = scmp.eq.s32.totalorder %s28, 0
      %p123 = por %p121, %p122
      %p124 = scmp.ne.s32.totalorder %s116, %s118
      %p125 = scmp.eq.s32.totalorder %s33, 1
      %p126 = por %p124, %p125
      %p127 = scmp.ne.s32.totalorder %s118, %s119
      %p128 = scmp.eq.s32.totalorder %s33, 0
      %p129 = por %p127, %p128
      %p130 = scmp.ne.s32.totalorder %s118, %s119
      %p131 = scmp.eq.s32.totalorder %s34, 1
      %p132 = por %p130, %p131
      %p134 = scmp.ne.s32.totalorder %s119, %s133
      %p135 = scmp.eq.s32.totalorder %s34, 0
      %p136 = por %p134, %p135
      %s138 = sadd.s32 %s137, 1
      %p141 = scmp.eq.s32.totalorder %s28, 1
      %p142 = scmp.ne.s32.totalorder %s137, %s139
      %p143 = scmp.eq.s32.totalorder %s28, 0
      %p144 = por %p142, %p143
      %p145 = scmp.ne.s32.totalorder %s137, %s139
      %p146 = scmp.eq.s32.totalorder %s33, 1
      %p147 = por %p145, %p146
      %p148 = scmp.ne.s32.totalorder %s139, %s140
      %p149 = scmp.eq.s32.totalorder %s33, 0
      %p150 = por %p148, %p149
      %p151 = scmp.ne.s32.totalorder %s139, %s140
      %p152 = scmp.eq.s32.totalorder %s34, 1
      %p153 = por %p151, %p152
      %p155 = scmp.ne.s32.totalorder %s140, %s154
      %p156 = scmp.eq.s32.totalorder %s34, 0
      %p157 = por %p155, %p156
      %s159 = sadd.s32 %s158, 1
      %p162 = scmp.eq.s32.totalorder %s28, 1
      %p163 = scmp.ne.s32.totalorder %s158, %s160
      %p164 = scmp.eq.s32.totalorder %s28, 0
      %p165 = por %p163, %p164
      %p166 = scmp.ne.s32.totalorder %s158, %s160
      %p167 = scmp.eq.s32.totalorder %s33, 1
      %p168 = por %p166, %p167
      %p169 = scmp.ne.s32.totalorder %s160, %s161
      %p170 = scmp.eq.s32.totalorder %s33, 0
      %p171 = por %p169, %p170
      %p172 = scmp.ne.s32.totalorder %s160, %s161
      %p173 = scmp.eq.s32.totalorder %s34, 1
      %p174 = por %p172, %p173
      %p176 = scmp.ne.s32.totalorder %s161, %s175
      %p177 = scmp.eq.s32.totalorder %s34, 0
      %p178 = por %p176, %p177
      %s180 = sadd.s32 %s179, 1
      %p183 = scmp.eq.s32.totalorder %s28, 1
      %p184 = scmp.ne.s32.totalorder %s179, %s181
      %p185 = scmp.eq.s32.totalorder %s28, 0
      %p186 = por %p184, %p185
      %p187 = scmp.ne.s32.totalorder %s179, %s181
      %p188 = scmp.eq.s32.totalorder %s33, 1
      %p189 = por %p187, %p188
      %p190 = scmp.ne.s32.totalorder %s181, %s182
      %p191 = scmp.eq.s32.totalorder %s33, 0
      %p192 = por %p190, %p191
      %p193 = scmp.ne.s32.totalorder %s181, %s182
      %p194 = scmp.eq.s32.totalorder %s34, 1
      %p195 = por %p193, %p194
      %p197 = scmp.ne.s32.totalorder %s182, %s196
      %p198 = scmp.eq.s32.totalorder %s34, 0
      %p199 = por %p197, %p198
      %s201 = sadd.s32 %s200, 1
      %p204 = scmp.eq.s32.totalorder %s28, 1
      %p205 = scmp.ne.s32.totalorder %s200, %s202
      %p206 = scmp.eq.s32.totalorder %s28, 0
      %p207 = por %p205, %p206
      %p208 = scmp.ne.s32.totalorder %s200, %s202
      %p209 = scmp.eq.s32.totalorder %s33, 1
      %p210 = por %p208, %p209
      %p211 = scmp.ne.s32.totalorder %s202, %s203
      %p212 = scmp.eq.s32.totalorder %s33, 0
      %p213 = por %p211, %p212
      %p214 = scmp.ne.s32.totalorder %s202, %s203
      %p215 = scmp.eq.s32.totalorder %s34, 1
      %p216 = por %p214, %p215
      %p218 = scmp.ne.s32.totalorder %s203, %s217
      %p219 = scmp.eq.s32.totalorder %s34, 0
      %p220 = por %p218, %p219
      %s222 = sadd.s32 %s221, 1
      %p225 = scmp.eq.s32.totalorder %s28, 1
      %p226 = scmp.ne.s32.totalorder %s221, %s223
      %p227 = scmp.eq.s32.totalorder %s28, 0
      %p228 = por %p226, %p227
      %p229 = scmp.ne.s32.totalorder %s221, %s223
      %p230 = scmp.eq.s32.totalorder %s33, 1
      %p231 = por %p229, %p230
      %p232 = scmp.ne.s32.totalorder %s223, %s224
      %p233 = scmp.eq.s32.totalorder %s33, 0
      %p234 = por %p232, %p233
      %p235 = scmp.ne.s32.totalorder %s223, %s224
      %p236 = scmp.eq.s32.totalorder %s34, 1
      %p237 = por %p235, %p236
      %p239 = scmp.ne.s32.totalorder %s224, %s238
      %p240 = scmp.eq.s32.totalorder %s34, 0
      %p241 = por %p239, %p240
      %s243 = sadd.s32 %s242, 1
      %p246 = scmp.eq.s32.totalorder %s28, 1
      %p247 = scmp.ne.s32.totalorder %s242, %s244
      %p248 = scmp.eq.s32.totalorder %s28, 0
      %p249 = por %p247, %p248
      %p250 = scmp.ne.s32.totalorder %s242, %s244
      %p251 = scmp.eq.s32.totalorder %s33, 1
      %p252 = por %p250, %p251
      %p253 = scmp.ne.s32.totalorder %s244, %s245
      %p254 = scmp.eq.s32.totalorder %s33, 0
      %p255 = por %p253, %p254
      %p256 = scmp.ne.s32.totalorder %s244, %s245
      %p257 = scmp.eq.s32.totalorder %s34, 1
      %p258 = por %p256, %p257
      %p260 = scmp.ne.s32.totalorder %s245, %s259
      %p261 = scmp.eq.s32.totalorder %s34, 0
      %p262 = por %p260, %p261
      %s264 = sadd.s32 %s263, 1
      %p267 = scmp.eq.s32.totalorder %s28, 1
      %p268 = scmp.ne.s32.totalorder %s263, %s265
      %p269 = scmp.eq.s32.totalorder %s28, 0
      %p270 = por %p268, %p269
      %p271 = scmp.ne.s32.totalorder %s263, %s265
      %p272 = scmp.eq.s32.totalorder %s33, 1
      %p273 = por %p271, %p272
      %p274 = scmp.ne.s32.totalorder %s265, %s266
      %p275 = scmp.eq.s32.totalorder %s33, 0
      %p276 = por %p274, %p275
      %p277 = scmp.ne.s32.totalorder %s265, %s266
      %p278 = scmp.eq.s32.totalorder %s34, 1
      %p279 = por %p277, %p278
      %p281 = scmp.ne.s32.totalorder %s266, %s280
      %p282 = scmp.eq.s32.totalorder %s34, 0
      %p283 = por %p281, %p282
      %s285 = sadd.s32 %s284, 1
      %p288 = scmp.eq.s32.totalorder %s28, 1
      %p289 = scmp.ne.s32.totalorder %s284, %s286
      %p290 = scmp.eq.s32.totalorder %s28, 0
      %p291 = por %p289, %p290
      %p292 = scmp.ne.s32.totalorder %s284, %s286
      %p293 = scmp.eq.s32.totalorder %s33, 1
      %p294 = por %p292, %p293
      %p295 = scmp.ne.s32.totalorder %s286, %s287
      %p296 = scmp.eq.s32.totalorder %s33, 0
      %p297 = por %p295, %p296
      %p298 = scmp.ne.s32.totalorder %s286, %s287
      %p299 = scmp.eq.s32.totalorder %s34, 1
      %p300 = por %p298, %p299
      %p302 = scmp.ne.s32.totalorder %s287, %s301
      %p303 = scmp.eq.s32.totalorder %s34, 0
      %p304 = por %p302, %p303
      %s306 = sadd.s32 %s305, 1
      %p309 = scmp.eq.s32.totalorder %s28, 1
      %p310 = scmp.ne.s32.totalorder %s305, %s307
      %p311 = scmp.eq.s32.totalorder %s28, 0
      %p312 = por %p310, %p311
      %p313 = scmp.ne.s32.totalorder %s305, %s307
      %p314 = scmp.eq.s32.totalorder %s33, 1
      %p315 = por %p313, %p314
      %p316 = scmp.ne.s32.totalorder %s307, %s308
      %p317 = scmp.eq.s32.totalorder %s33, 0
      %p318 = por %p316, %p317
      %p319 = scmp.ne.s32.totalorder %s307, %s308
      %p320 = scmp.eq.s32.totalorder %s34, 1
      %p321 = por %p319, %p320
      %p323 = scmp.ne.s32.totalorder %s308, %s322
      %p324 = scmp.eq.s32.totalorder %s34, 0
      %p325 = por %p323, %p324
      %s326 = ssub.s32 %s36, %s43
      %p327 = scmp.eq.s32.totalorder %s326, 0
      %s329 = sadd.s32 %s328, 1
      %s330 = scalar_select %p327, %s328, %s329
      %p333 = pneg %p327
      %p334 = scmp.eq.s32.totalorder %s28, 1
      %p335 = por %p333, %p334
      %p336 = scmp.ne.s32.totalorder %s328, %s331
      %p337 = scmp.eq.s32.totalorder %s28, 0
      %p338 = por %p336, %p337
      %p339 = scmp.ne.s32.totalorder %s328, %s331
      %p340 = scmp.eq.s32.totalorder %s33, 1
      %p341 = por %p339, %p340
      %p342 = scmp.ne.s32.totalorder %s331, %s332
      %p343 = scmp.eq.s32.totalorder %s33, 0
      %p344 = por %p342, %p343
      %p345 = scmp.ne.s32.totalorder %s331, %s332
      %p346 = scmp.eq.s32.totalorder %s34, 1
      %p347 = por %p345, %p346
      %p349 = scmp.ne.s32.totalorder %s332, %s348
      %p350 = scmp.eq.s32.totalorder %s34, 0
      %p351 = por %p349, %p350
      %s352 = ssub.s32 %s36, %s43
      %p353 = scmp.eq.s32.totalorder %s352, 0
      %s355 = sadd.s32 %s354, 1
      %s356 = scalar_select %p353, %s354, %s355
      %p359 = pneg %p353
      %p360 = scmp.eq.s32.totalorder %s28, 1
      %p361 = por %p359, %p360
      %p362 = scmp.ne.s32.totalorder %s354, %s357
      %p363 = scmp.eq.s32.totalorder %s28, 0
      %p364 = por %p362, %p363
      %p365 = scmp.ne.s32.totalorder %s354, %s357
      %p366 = scmp.eq.s32.totalorder %s33, 1
      %p367 = por %p365, %p366
      %p368 = scmp.ne.s32.totalorder %s357, %s358
      %p369 = scmp.eq.s32.totalorder %s33, 0
      %p370 = por %p368, %p369
      %p371 = scmp.ne.s32.totalorder %s357, %s358
      %p372 = scmp.eq.s32.totalorder %s34, 1
      %p373 = por %p371, %p372
      %p375 = scmp.ne.s32.totalorder %s358, %s374
      %p376 = scmp.eq.s32.totalorder %s34, 0
      %p377 = por %p375, %p376
      %s378 = ssub.s32 %s36, %s43
      %p379 = scmp.eq.s32.totalorder %s378, 0
      %s381 = sadd.s32 %s380, 1
      %s382 = scalar_select %p379, %s380, %s381
      %p385 = pneg %p379
      %p386 = scmp.eq.s32.totalorder %s28, 1
      %p387 = por %p385, %p386
      %p388 = scmp.ne.s32.totalorder %s380, %s383
      %p389 = scmp.eq.s32.totalorder %s28, 0
      %p390 = por %p388, %p389
      %p391 = scmp.ne.s32.totalorder %s380, %s383
      %p392 = scmp.eq.s32.totalorder %s33, 1
      %p393 = por %p391, %p392
      %p394 = scmp.ne.s32.totalorder %s383, %s384
      %p395 = scmp.eq.s32.totalorder %s33, 0
      %p396 = por %p394, %p395
      %p397 = scmp.ne.s32.totalorder %s383, %s384
      %p398 = scmp.eq.s32.totalorder %s34, 1
      %p399 = por %p397, %p398
      %p401 = scmp.ne.s32.totalorder %s384, %s400
      %p402 = scmp.eq.s32.totalorder %s34, 0
      %p403 = por %p401, %p402
      %s405 = sadd.s32 %s404, 1
      %p408 = scmp.eq.s32.totalorder %s28, 1
      %p409 = scmp.ne.s32.totalorder %s404, %s406
      %p410 = scmp.eq.s32.totalorder %s28, 0
      %p411 = por %p409, %p410
      %p412 = scmp.ne.s32.totalorder %s404, %s406
      %p413 = scmp.eq.s32.totalorder %s33, 1
      %p414 = por %p412, %p413
      %p415 = scmp.ne.s32.totalorder %s406, %s407
      %p416 = scmp.eq.s32.totalorder %s33, 0
      %p417 = por %p415, %p416
      %p418 = scmp.ne.s32.totalorder %s406, %s407
      %p419 = scmp.eq.s32.totalorder %s34, 1
      %p420 = por %p418, %p419
      %p422 = scmp.ne.s32.totalorder %s407, %s421
      %p423 = scmp.eq.s32.totalorder %s34, 0
      %p424 = por %p422, %p423
      %s425 = ssub.s32 %s35, %s47
      %p426 = scmp.eq.s32.totalorder %s425, 0
      %s428 = sadd.s32 %s427, 1
      %s429 = scalar_select %p426, %s427, %s428
      %p432 = pneg %p426
      %p433 = scmp.eq.s32.totalorder %s28, 1
      %p434 = por %p432, %p433
      %p435 = scmp.ne.s32.totalorder %s427, %s430
      %p436 = scmp.eq.s32.totalorder %s28, 0
      %p437 = por %p435, %p436
      %p438 = scmp.ne.s32.totalorder %s427, %s430
      %p439 = scmp.eq.s32.totalorder %s33, 1
      %p440 = por %p438, %p439
      %p441 = scmp.ne.s32.totalorder %s430, %s431
      %p442 = scmp.eq.s32.totalorder %s33, 0
      %p443 = por %p441, %p442
      %p444 = scmp.ne.s32.totalorder %s430, %s431
      %p445 = scmp.eq.s32.totalorder %s34, 1
      %p446 = por %p444, %p445
      %p448 = scmp.ne.s32.totalorder %s431, %s447
      %p449 = scmp.eq.s32.totalorder %s34, 0
      %p450 = por %p448, %p449
      %p451 = scmp.le.s32.totalorder 1, %s28
      %p452 = scmp.lt.s32.totalorder %s28, 3
      %p453 = pnand %p451, %p452
      %p454 = pneg %p453
      // Predicated region
      $region9: #{tpu_custom_call.1} parent=5 // pred_check
        _
      $region10: #{tpu_custom_call.1} parent=5 // pred_check_branch
        %456 = sbr.rel (%p453) target = $region12
      $region11: #{tpu_custom_call.1} parent=5 // pred_region
        %s457 = ssub.s32 %s28, 1
        // Predicated region
        $region13: #{tpu_custom_call.1} parent=11 // pred_check
          %p458 = pneg %p87
        $region14: #{tpu_custom_call.1} parent=11 // pred_check_branch
          %460 = sbr.rel (%p458) target = $region16
        $region15: #{tpu_custom_call.1} parent=11 // pred_region
          %462 = vsyncadd [#allocation6], 0
          %s464 = sshll.u32 %s1, 4
          %s465 = int_to_ptr.hbm [resolvable:$true] %s464
          %s466 = sshll.u32 [#allocation5], 4
          %s467 = int_to_ptr.vmem [resolvable:$true] %s466
          %469 = dma.hbm_to_vmem [thread:$0]  %s465, 16, %s467, [#allocation6]
        $region16: #{tpu_custom_call.1} parent=11 // pred_fallthru
          _
        // Predicated region
        $region17: #{tpu_custom_call.1} parent=11 // pred_check
          %p470 = pneg %p108
        $region18: #{tpu_custom_call.1} parent=11 // pred_check_branch
          %472 = sbr.rel (%p470) target = $region20
        $region19: #{tpu_custom_call.1} parent=11 // pred_region
          _
        $region20: #{tpu_custom_call.1} parent=11 // pred_fallthru
          _
        // Predicated region
        $region21: #{tpu_custom_call.1} parent=11 // pred_check
          %p473 = pneg %p129
        $region22: #{tpu_custom_call.1} parent=11 // pred_check_branch
          %475 = sbr.rel (%p473) target = $region24
        $region23: #{tpu_custom_call.1} parent=11 // pred_region
          _
        $region24: #{tpu_custom_call.1} parent=11 // pred_fallthru
          _
        // Predicated region
        $region25: #{tpu_custom_call.1} parent=11 // pred_check
          %p476 = pneg %p150
        $region26: #{tpu_custom_call.1} parent=11 // pred_check_branch
          %478 = sbr.rel (%p476) target = $region28
        $region27: #{tpu_custom_call.1} parent=11 // pred_region
          _
        $region28: #{tpu_custom_call.1} parent=11 // pred_fallthru
          _
        // Predicated region
        $region29: #{tpu_custom_call.1} parent=11 // pred_check
          %p479 = pneg %p171
        $region30: #{tpu_custom_call.1} parent=11 // pred_check_branch
          %481 = sbr.rel (%p479) target = $region32
        $region31: #{tpu_custom_call.1} parent=11 // pred_region
          _
        $region32: #{tpu_custom_call.1} parent=11 // pred_fallthru
          _
        // Predicated region
        $region33: #{tpu_custom_call.1} parent=11 // pred_check
          %p482 = pneg %p192
        $region34: #{tpu_custom_call.1} parent=11 // pred_check_branch
          %484 = sbr.rel (%p482) target = $region36
        $region35: #{tpu_custom_call.1} parent=11 // pred_region
          _
        $region36: #{tpu_custom_call.1} parent=11 // pred_fallthru
          _
        // Predicated region
        $region37: #{tpu_custom_call.1} parent=11 // pred_check
          %p485 = pneg %p213
        $region38: #{tpu_custom_call.1} parent=11 // pred_check_branch
          %487 = sbr.rel (%p485) target = $region40
        $region39: #{tpu_custom_call.1} parent=11 // pred_region
          _
        $region40: #{tpu_custom_call.1} parent=11 // pred_fallthru
          _
        // Predicated region
        $region41: #{tpu_custom_call.1} parent=11 // pred_check
          %p488 = pneg %p234
        $region42: #{tpu_custom_call.1} parent=11 // pred_check_branch
          %490 = sbr.rel (%p488) target = $region44
        $region43: #{tpu_custom_call.1} parent=11 // pred_region
          _
        $region44: #{tpu_custom_call.1} parent=11 // pred_fallthru
          _
        // Predicated region
        $region45: #{tpu_custom_call.1} parent=11 // pred_check
          %p491 = pneg %p255
        $region46: #{tpu_custom_call.1} parent=11 // pred_check_branch
          %493 = sbr.rel (%p491) target = $region48
        $region47: #{tpu_custom_call.1} parent=11 // pred_region
          _
        $region48: #{tpu_custom_call.1} parent=11 // pred_fallthru
          _
        // Predicated region
        $region49: #{tpu_custom_call.1} parent=11 // pred_check
          %p494 = pneg %p276
        $region50: #{tpu_custom_call.1} parent=11 // pred_check_branch
          %496 = sbr.rel (%p494) target = $region52
        $region51: #{tpu_custom_call.1} parent=11 // pred_region
          _
        $region52: #{tpu_custom_call.1} parent=11 // pred_fallthru
          _
        // Predicated region
        $region53: #{tpu_custom_call.1} parent=11 // pred_check
          %p497 = pneg %p297
        $region54: #{tpu_custom_call.1} parent=11 // pred_check_branch
          %499 = sbr.rel (%p497) target = $region56
        $region55: #{tpu_custom_call.1} parent=11 // pred_region
          _
        $region56: #{tpu_custom_call.1} parent=11 // pred_fallthru
          _
        // Predicated region
        $region57: #{tpu_custom_call.1} parent=11 // pred_check
          %p500 = pneg %p318
        $region58: #{tpu_custom_call.1} parent=11 // pred_check_branch
          %502 = sbr.rel (%p500) target = $region60
        $region59: #{tpu_custom_call.1} parent=11 // pred_region
          _
        $region60: #{tpu_custom_call.1} parent=11 // pred_fallthru
          _
        // Predicated region
        $region61: #{tpu_custom_call.1} parent=11 // pred_check
          %p503 = pneg %p344
        $region62: #{tpu_custom_call.1} parent=11 // pred_check_branch
          %505 = sbr.rel (%p503) target = $region64
        $region63: #{tpu_custom_call.1} parent=11 // pred_region
          %507 = vsyncadd [#allocation9], 0
          %s508 = smul.addr %s38, 4
          %s509 = scalar_lea.hbm %s13, %s508
          %s510 = sshll.u32 %s509, 4
          %s511 = int_to_ptr.hbm [resolvable:$true] %s510
          %s512 = sshll.u32 [#allocation8], 4
          %s513 = int_to_ptr.vmem [resolvable:$true] %s512
          %518 = dma.hbm_to_vmem [thread:$0]  %s511, 256, %s513, [#allocation9], 64, 64, 4
        $region64: #{tpu_custom_call.1} parent=11 // pred_fallthru
          _
        // Predicated region
        $region65: #{tpu_custom_call.1} parent=11 // pred_check
          %p519 = pneg %p370
        $region66: #{tpu_custom_call.1} parent=11 // pred_check_branch
          %521 = sbr.rel (%p519) target = $region68
        $region67: #{tpu_custom_call.1} parent=11 // pred_region
          %p522 = scmp.lt.s32.totalorder %s38, 0
          %s523 = scalar_select %p522, %s38, 0
          %s524 = scalar_lea.vmem %s14, %s523
        $region68: #{tpu_custom_call.1} parent=11 // pred_fallthru
          _
        // Predicated region
        $region69: #{tpu_custom_call.1} parent=11 // pred_check
          %p525 = pneg %p396
        $region70: #{tpu_custom_call.1} parent=11 // pred_check_branch
          %527 = sbr.rel (%p525) target = $region72
        $region71: #{tpu_custom_call.1} parent=11 // pred_region
          %s528 = smul.u32 16, %s38
          %p529 = scmp.lt.s32.totalorder %s528, 15
          %s530 = scalar_select %p529, %s528, 15
          %s531 = smul.addr %s530, 4
          %s532 = scalar_lea.vmem %s15, %s531
          %s533 = smul.u32 16, %s38
        $region72: #{tpu_custom_call.1} parent=11 // pred_fallthru
          _
        // Predicated region
        $region73: #{tpu_custom_call.1} parent=11 // pred_check
          %p534 = pneg %p417
        $region74: #{tpu_custom_call.1} parent=11 // pred_check_branch
          %536 = sbr.rel (%p534) target = $region76
        $region75: #{tpu_custom_call.1} parent=11 // pred_region
          _
        $region76: #{tpu_custom_call.1} parent=11 // pred_fallthru
          _
      $region12: #{tpu_custom_call.1} parent=5 // pred_fallthru
        _
      %p537 = scmp.lt.s32.totalorder %s28, 2
      // Predicated region
      $region77: #{tpu_custom_call.1} parent=5 // pred_check
        %p538 = pneg %p537
      $region78: #{tpu_custom_call.1} parent=5 // pred_check_branch
        %540 = sbr.rel (%p538) target = $region80
      $region79: #{tpu_custom_call.1} parent=5 // pred_region
        // Predicated region
        $region81: #{tpu_custom_call.1} parent=79 // pred_check
          %p541 = pneg %p60
        $region82: #{tpu_custom_call.1} parent=79 // pred_check_branch
          %543 = sbr.rel (%p541) target = $region84
        $region83: #{tpu_custom_call.1} parent=79 // pred_region
          %p544 = scmp.lt.s32.totalorder %s35, 1
          %s545 = scalar_select %p544, %s35, 1
          %s546 = smul.addr %s545, 8
          %s547 = scalar_lea.vmem %s0, %s546
        $region84: #{tpu_custom_call.1} parent=79 // pred_fallthru
          _
      $region80: #{tpu_custom_call.1} parent=5 // pred_fallthru
        _
      %p548 = scmp.le.s32.totalorder 1, %s28
      %p549 = scmp.lt.s32.totalorder %s28, 3
      %p550 = pnand %p548, %p549
      %p551 = pneg %p550
      // Predicated region
      $region85: #{tpu_custom_call.1} parent=5 // pred_check
        _
      $region86: #{tpu_custom_call.1} parent=5 // pred_check_branch
        %553 = sbr.rel (%p550) target = $region88
      $region87: #{tpu_custom_call.1} parent=5 // pred_region
        %s554 = ssub.s32 %s28, 1
        // Predicated region
        $region89: #{tpu_custom_call.1} parent=87 // pred_check
          %p555 = pneg %p87
        $region90: #{tpu_custom_call.1} parent=87 // pred_check_branch
          %557 = sbr.rel (%p555) target = $region92
        $region91: #{tpu_custom_call.1} parent=87 // pred_region
          %559 = dma.done [#allocation6], 16
        $region92: #{tpu_custom_call.1} parent=87 // pred_fallthru
          _
        // Predicated region
        $region93: #{tpu_custom_call.1} parent=87 // pred_check
          %p560 = pneg %p344
        $region94: #{tpu_custom_call.1} parent=87 // pred_check_branch
          %562 = sbr.rel (%p560) target = $region96
        $region95: #{tpu_custom_call.1} parent=87 // pred_region
          %564 = dma.done [#allocation9], 256
        $region96: #{tpu_custom_call.1} parent=87 // pred_fallthru
          _
        %p565 = scmp.lt.s32.totalorder %s37, 1
        %s566 = scalar_select %p565, %s37, 1
        %s567 = smul.addr %s566, 8
        %s568 = scalar_lea.vmem %s0, %s567
        %p569 = pneg %p66
        %p570 = pneg %p63
        %p571 = pneg %p87
        %p572 = pneg %p84
        %p573 = pneg %p108
        %p574 = pneg %p105
        %p575 = pneg %p129
        %p576 = pneg %p126
        %p577 = pneg %p150
        %p578 = pneg %p147
        %p579 = pneg %p171
        %p580 = pneg %p168
        %p581 = pneg %p192
        %p582 = pneg %p189
        %p583 = pneg %p213
        %p584 = pneg %p210
        %p585 = pneg %p234
        %p586 = pneg %p231
        %p587 = pneg %p255
        %p588 = pneg %p252
        %p589 = pneg %p276
        %p590 = pneg %p273
        %p591 = pneg %p297
        %p592 = pneg %p294
        %p593 = pneg %p318
        %p594 = pneg %p315
        %p595 = pneg %p344
        %p596 = pneg %p341
        %p597 = scmp.lt.s32.totalorder %s38, 0
        %s598 = scalar_select %p597, %s38, 0
        %s599 = scalar_lea.vmem %s14, %s598
        %p600 = pneg %p370
        %p601 = pneg %p367
        %s602 = smul.u32 16, %s38
        %p603 = scmp.lt.s32.totalorder %s602, 15
        %s604 = scalar_select %p603, %s602, 15
        %s605 = smul.addr %s604, 4
        %s606 = scalar_lea.vmem %s15, %s605
        %p607 = pneg %p396
        %p608 = pneg %p393
        %p609 = pneg %p417
        %p610 = pneg %p414
        %p611 = pneg %p443
        %p612 = pneg %p440
        %s613 = sand.u32 %s430, 1
        %s614 = scalar_lea.sflag [#allocation7], %s613
        %s615 = sand.u32 %s430, 1
        %s616 = smul.addr %s615, 8
        %s617 = scalar_lea.vmem [#allocation10], %s616
        %p618 = scmp.lt.s32.totalorder %s37, 1
        %s619 = scalar_select %p618, %s37, 1
        %s620 = smul.addr %s619, 8
        %s621 = scalar_lea.vmem %s0, %s620
        %p622 = scmp.lt.s32.totalorder %s38, 0
        %s623 = scalar_select %p622, %s38, 0
        %s624 = scalar_lea.vmem %s14, %s623
        %s625 = smul.u32 16, %s38
        %p626 = scmp.lt.s32.totalorder %s625, 15
        %s627 = scalar_select %p626, %s625, 15
        %s628 = smul.addr %s627, 4
        %s629 = scalar_lea.vmem %s15, %s628
        %s630 = smul.u32 16, %s38
        %p632 = scmp.eq.s32.totalorder %s38, 0
        // Predicated region
        $region97: #{tpu_custom_call.1} parent=87 // pred_check
          %p633 = pneg %p632
        $region98: #{tpu_custom_call.1} parent=87 // pred_check_branch
          %635 = sbr.rel (%p633) target = $region100
        $region99: #{tpu_custom_call.1} parent=87 // pred_region
          %v636 = vld [vmem:[%s621] sm:$0xff]
          %v637 = vld [vmem:[#allocation5] sm:$0x1]
          %v638 = vld [vmem:[%s2] sm:$0x1]
          %vm639 = vcmask 261120
          %v640 = vsel %vm639, %v636, 0.0
          %641 = vadd.xlane.f32.xlu0 %v640
          %v642 = vpop.xlane.xlu0 %641
          %v643 = vrcp.pop 32.0
          %v644 = vmul.f32 32.0, %v643
          %v645 = vsub.f32 1.0, %v644
          %v646 = vmul.f32 %v643, %v645
          %v647 = vadd.f32 %v643, %v646
          %vm648 = vweird.f32 %v643
          %v649 = vsel %vm648, %v643, %v647
          %v650 = vmul.f32 %v642, %v649
          %v651 = vsub.f32 %v636, %v650
          %v652 = vmul.f32 %v651, %v651
          %v653 = vsel %vm639, %v652, 0.0
          %654 = vadd.xlane.f32.xlu0 %v653
          %v655 = vpop.xlane.xlu0 %654
          %v656 = vmul.f32 %v655, %v649
          %v657 = vadd.f32 %v656, 1e-05
          %v658 = vrsqrt.pop %v657
          %v659 = vmul.f32 %v658, %v657
          %v660 = vmul.f32 %v659, %v658
          %v661 = vmul.f32 0.5, %v660
          %v662 = vsub.f32 1.5, %v661
          %v663 = vmul.f32 %v658, %v662
          %vm664 = vweird.f32 %v657
          %vm665 = vweird.f32 %v658
          %vm666 = vmor %vm664, %vm665
          %v667 = vsel %vm666, %v658, %v663
          %v668 = vmul.f32 %v651, %v667
          %v670 = vperm.slane %v637, 0
          %v672 = vmul.f32 %v668, %v670
          %v674 = vperm.slane %v638, 0
          %v676 = vadd.f32 %v672, %v674
          %v677 = vpack.c.bf16 %v676, %v676
          %v678 = vld [vmem:[%s3] sm:$0xf]
          %v679 = vld [vmem:[%s3 + $0x4] sm:$0xf]
          %v680 = vld [vmem:[%s3 + $0x8] sm:$0xf]
          %v681 = vld [vmem:[%s3 + $0xc] sm:$0xf]
          %v682 = vld [vmem:[%s4] sm:$0x1]
          %v684 = vperm.slane %v682, 0
          %v690 = vunpack.c.l.b16 %v678
          %v691 = vunpack.c.l.b16 %v679
          %v692 = vunpack.c.l.b16 %v680
          %v693 = vunpack.c.l.b16 %v681
          %v694 = vpack.c.b16 %v691, %v690
          %v695 = vpack.c.b16 %v693, %v692
          %v699 = vsel %vm639, %v677, 0
          %701 = vmatpush.bf16.msra.mxu0 0
          %702 = vmatpush.bf16.msra.mxu0 0
          %703 = vmatpush.bf16.msra.mxu0 0
          %704 = vmatpush.bf16.msra.mxu0 0
          %705 = vmatpush.bf16.msra.mxu0 0
          %706 = vmatpush.bf16.msra.mxu0 0
          %707 = vmatpush.bf16.msra.mxu0 %v695
          %708 = vmatpush.bf16.msra.mxu0 %v694
          %709 = vmatmul.bf16.gmra.mxu0 %v699
          %v710 = vpop.f32.mrf.mxu0
          %v711 = vadd.f32 %v684, %v710
          %v712 = vpop.f32.mrf.mxu0
          %713 = vdwg.mxu0
          %v714 = vld [vmem:[%s5] sm:$0xf]
          %v715 = vld [vmem:[%s5 + $0x4] sm:$0xf]
          %v716 = vld [vmem:[%s5 + $0x8] sm:$0xf]
          %v717 = vld [vmem:[%s5 + $0xc] sm:$0xf]
          %v718 = vld [vmem:[%s6] sm:$0x1]
          %v720 = vperm.slane %v718, 0
          %v726 = vunpack.c.l.b16 %v714
          %v727 = vunpack.c.l.b16 %v715
          %v728 = vunpack.c.l.b16 %v716
          %v729 = vunpack.c.l.b16 %v717
          %v730 = vpack.c.b16 %v727, %v726
          %v731 = vpack.c.b16 %v729, %v728
          %734 = vmatpush.bf16.msra.mxu0 0
          %735 = vmatpush.bf16.msra.mxu0 0
          %736 = vmatpush.bf16.msra.mxu0 0
          %737 = vmatpush.bf16.msra.mxu0 0
          %738 = vmatpush.bf16.msra.mxu0 0
          %739 = vmatpush.bf16.msra.mxu0 0
          %740 = vmatpush.bf16.msra.mxu0 %v731
          %741 = vmatpush.bf16.msra.mxu0 %v730
          %742 = vmatmul.bf16.gmra.mxu0 %v699
          %v743 = vpop.f32.mrf.mxu0
          %v744 = vadd.f32 %v720, %v743
          %v745 = vpop.f32.mrf.mxu0
          %746 = vdwg.mxu0
          %v747 = vld [vmem:[%s7] sm:$0xf]
          %v748 = vld [vmem:[%s7 + $0x4] sm:$0xf]
          %v749 = vld [vmem:[%s7 + $0x8] sm:$0xf]
          %v750 = vld [vmem:[%s7 + $0xc] sm:$0xf]
          %v751 = vld [vmem:[%s8] sm:$0x1]
          %v753 = vperm.slane %v751, 0
          %v759 = vunpack.c.l.b16 %v747
          %v760 = vunpack.c.l.b16 %v748
          %v761 = vunpack.c.l.b16 %v749
          %v762 = vunpack.c.l.b16 %v750
          %v763 = vpack.c.b16 %v760, %v759
          %v764 = vpack.c.b16 %v762, %v761
          %767 = vmatpush.bf16.msra.mxu0 0
          %768 = vmatpush.bf16.msra.mxu0 0
          %769 = vmatpush.bf16.msra.mxu0 0
          %770 = vmatpush.bf16.msra.mxu0 0
          %771 = vmatpush.bf16.msra.mxu0 0
          %772 = vmatpush.bf16.msra.mxu0 0
          %773 = vmatpush.bf16.msra.mxu0 %v764
          %774 = vmatpush.bf16.msra.mxu0 %v763
          %775 = vmatmul.bf16.gmra.mxu0 %v699
          %v776 = vpop.f32.mrf.mxu0
          %v777 = vadd.f32 %v753, %v776
          %v778 = vpop.f32.mrf.mxu0
          %779 = vdwg.mxu0
          %v780 = vpack.c.bf16 %v711, %v711
          %v781 = vpack.c.bf16 %v744, %v744
          %v782 = vpack.c.bf16 %v777, %v777
          %v783 = vld [vmem:[%s9] sm:$0xf]
          %v784 = vld [vmem:[%s9 + $0x4] sm:$0xf]
          %v785 = vld [vmem:[%s9 + $0x8] sm:$0xf]
          %v786 = vld [vmem:[%s9 + $0xc] sm:$0xf]
          %vm787 = vcmask 64512
          %v789 = vsel %vm787, %v780, 0
          %v792 = vsel %vm787, %v781, 0
          %794 = vmatpush.bf16.xpose.msra.mxu0 0
          %795 = vmatpush.bf16.xpose.msra.mxu0 0
          %796 = vmatpush.bf16.xpose.msra.mxu0 0
          %797 = vmatpush.bf16.xpose.msra.mxu0 0
          %798 = vmatpush.bf16.xpose.msra.mxu0 0
          %799 = vmatpush.bf16.xpose.msra.mxu0 0
          %800 = vmatpush.bf16.xpose.msra.mxu0 0
          %801 = vmatpush.bf16.xpose.msra.mxu0 %v792
          %802 = vmatmul.bf16.gmra.mxu0 %v789
          %v803 = vpop.f32.mrf.mxu0
          %v804 = vadd.f32 0.0, %v803
          %v805 = vpop.f32.mrf.mxu0
          %806 = vdwg.mxu0
          %v807 = vsel %vm787, %v804, -inf
          %808 = vmax.xlane.f32.xlu0 %v807
          %v809 = vpop.xlane.xlu0 %808
          %v810 = vsub.f32 %v804, %v809
          %v811 = vmul.f32 %v810, 1.442695
          %v812 = vpow.pop %v811
          %v813 = vsel %vm787, %v812, 0.0
          %814 = vadd.xlane.f32.xlu0 %v813
          %v815 = vpop.xlane.xlu0 %814
          %v816 = vrcp.pop %v815
          %v817 = vmul.f32 %v812, %v816
          %v818 = vpack.c.bf16 %v817, %v817
          %v820 = vsel %vm787, %v818, 0
          %vm822 = vcmask 1043456
          %v824 = vsel %vm822, %v782, 0
          %826 = vmatpush.bf16.msra.mxu0 0
          %827 = vmatpush.bf16.msra.mxu0 0
          %828 = vmatpush.bf16.msra.mxu0 0
          %829 = vmatpush.bf16.msra.mxu0 0
          %830 = vmatpush.bf16.msra.mxu0 0
          %831 = vmatpush.bf16.msra.mxu0 0
          %832 = vmatpush.bf16.msra.mxu0 0
          %833 = vmatpush.bf16.msra.mxu0 %v824
          %834 = vmatmul.bf16.gmra.mxu0 %v820
          %v835 = vpop.f32.mrf.mxu0
          %v836 = vadd.f32 0.0, %v835
          %v837 = vpop.f32.mrf.mxu0
          %838 = vdwg.mxu0
          %v839 = vpack.c.bf16 %v836, %v836
          %v841 = vunpack.c.l.b16 %v780
          %v842 = vpack.c.b16 %v841, %v841
          %843 = vrot.lane.b32.xlu0 %v842, 120
          %v844 = vpop.permute.xlu0 %843
          %v846 = vunpack.c.l.b16 %v781
          %v847 = vpack.c.b16 %v846, %v846
          %848 = vrot.lane.b32.xlu0 %v847, 120
          %v849 = vpop.permute.xlu0 %848
          %v851 = vsel %vm787, %v844, 0
          %v854 = vsel %vm787, %v849, 0
          %856 = vmatpush.bf16.xpose.msra.mxu0 0
          %857 = vmatpush.bf16.xpose.msra.mxu0 0
          %858 = vmatpush.bf16.xpose.msra.mxu0 0
          %859 = vmatpush.bf16.xpose.msra.mxu0 0
          %860 = vmatpush.bf16.xpose.msra.mxu0 0
          %861 = vmatpush.bf16.xpose.msra.mxu0 0
          %862 = vmatpush.bf16.xpose.msra.mxu0 0
          %863 = vmatpush.bf16.xpose.msra.mxu0 %v854
          %864 = vmatmul.bf16.gmra.mxu0 %v851
          %v865 = vpop.f32.mrf.mxu0
          %v866 = vadd.f32 0.0, %v865
          %v867 = vpop.f32.mrf.mxu0
          %868 = vdwg.mxu0
          %v869 = vsel %vm787, %v866, -inf
          %870 = vmax.xlane.f32.xlu0 %v869
          %v871 = vpop.xlane.xlu0 %870
          %v872 = vsub.f32 %v866, %v871
          %v873 = vmul.f32 %v872, 1.442695
          %v874 = vpow.pop %v873
          %v875 = vsel %vm787, %v874, 0.0
          %876 = vadd.xlane.f32.xlu0 %v875
          %v877 = vpop.xlane.xlu0 %876
          %v878 = vrcp.pop %v877
          %v879 = vmul.f32 %v874, %v878
          %v880 = vpack.c.bf16 %v879, %v879
          %v882 = vunpack.c.l.b16 %v782
          %v883 = vpack.c.b16 %v882, %v882
          %884 = vrot.lane.b32.xlu0 %v883, 120
          %v885 = vpop.permute.xlu0 %884
          %v887 = vsel %vm787, %v880, 0
          %v890 = vsel %vm822, %v885, 0
          %892 = vmatpush.bf16.msra.mxu0 0
          %893 = vmatpush.bf16.msra.mxu0 0
          %894 = vmatpush.bf16.msra.mxu0 0
          %895 = vmatpush.bf16.msra.mxu0 0
          %896 = vmatpush.bf16.msra.mxu0 0
          %897 = vmatpush.bf16.msra.mxu0 0
          %898 = vmatpush.bf16.msra.mxu0 0
          %899 = vmatpush.bf16.msra.mxu0 %v890
          %900 = vmatmul.bf16.gmra.mxu0 %v887
          %v901 = vpop.f32.mrf.mxu0
          %v902 = vadd.f32 0.0, %v901
          %v903 = vpop.f32.mrf.mxu0
          %904 = vdwg.mxu0
          %v905 = vpack.c.bf16 %v902, %v902
          %v907 = vsel %vm787, %v905, 0
          %v910 = vsel %vm822, %v784, 0
          %912 = vmatpush.bf16.msra.mxu0 0
          %913 = vmatpush.bf16.msra.mxu0 0
          %914 = vmatpush.bf16.msra.mxu0 0
          %915 = vmatpush.bf16.msra.mxu0 0
          %916 = vmatpush.bf16.msra.mxu0 0
          %917 = vmatpush.bf16.msra.mxu0 0
          %918 = vmatpush.bf16.msra.mxu0 0
          %919 = vmatpush.bf16.msra.mxu0 %v910
          %920 = vmatmul.bf16.gmra.mxu0 %v907
          %v921 = vpop.f32.mrf.mxu0
          %v922 = vadd.f32 0.0, %v921
          %v923 = vpop.f32.mrf.mxu0
          %924 = vdwg.mxu0
          %v926 = vsel %vm787, %v839, 0
          %v929 = vsel %vm822, %v783, 0
          %931 = vmatpush.bf16.msra.mxu0 0
          %932 = vmatpush.bf16.msra.mxu0 0
          %933 = vmatpush.bf16.msra.mxu0 0
          %934 = vmatpush.bf16.msra.mxu0 0
          %935 = vmatpush.bf16.msra.mxu0 0
          %936 = vmatpush.bf16.msra.mxu0 0
          %937 = vmatpush.bf16.msra.mxu0 0
          %938 = vmatpush.bf16.msra.mxu0 %v929
          %939 = vmatmul.bf16.gmra.mxu0 %v926
          %v940 = vpop.f32.mrf.mxu0
          %v941 = vadd.f32 %v922, %v940
          %v942 = vpop.f32.mrf.mxu0
          %943 = vdwg.mxu0
          %944 = vrot.lane.b32.xlu0 %v842, 112
          %v945 = vpop.permute.xlu0 %944
          %946 = vrot.lane.b32.xlu0 %v847, 112
          %v947 = vpop.permute.xlu0 %946
          %v949 = vsel %vm787, %v945, 0
          %v952 = vsel %vm787, %v947, 0
          %954 = vmatpush.bf16.xpose.msra.mxu0 0
          %955 = vmatpush.bf16.xpose.msra.mxu0 0
          %956 = vmatpush.bf16.xpose.msra.mxu0 0
          %957 = vmatpush.bf16.xpose.msra.mxu0 0
          %958 = vmatpush.bf16.xpose.msra.mxu0 0
          %959 = vmatpush.bf16.xpose.msra.mxu0 0
          %960 = vmatpush.bf16.xpose.msra.mxu0 0
          %961 = vmatpush.bf16.xpose.msra.mxu0 %v952
          %962 = vmatmul.bf16.gmra.mxu0 %v949
          %v963 = vpop.f32.mrf.mxu0
          %v964 = vadd.f32 0.0, %v963
          %v965 = vpop.f32.mrf.mxu0
          %966 = vdwg.mxu0
          %v967 = vsel %vm787, %v964, -inf
          %968 = vmax.xlane.f32.xlu0 %v967
          %v969 = vpop.xlane.xlu0 %968
          %v970 = vsub.f32 %v964, %v969
          %v971 = vmul.f32 %v970, 1.442695
          %v972 = vpow.pop %v971
          %v973 = vsel %vm787, %v972, 0.0
          %974 = vadd.xlane.f32.xlu0 %v973
          %v975 = vpop.xlane.xlu0 %974
          %v976 = vrcp.pop %v975
          %v977 = vmul.f32 %v972, %v976
          %v978 = vpack.c.bf16 %v977, %v977
          %979 = vrot.lane.b32.xlu0 %v883, 112
          %v980 = vpop.permute.xlu0 %979
          %v982 = vsel %vm787, %v978, 0
          %v985 = vsel %vm822, %v980, 0
          %987 = vmatpush.bf16.msra.mxu0 0
          %988 = vmatpush.bf16.msra.mxu0 0
          %989 = vmatpush.bf16.msra.mxu0 0
          %990 = vmatpush.bf16.msra.mxu0 0
          %991 = vmatpush.bf16.msra.mxu0 0
          %992 = vmatpush.bf16.msra.mxu0 0
          %993 = vmatpush.bf16.msra.mxu0 0
          %994 = vmatpush.bf16.msra.mxu0 %v985
          %995 = vmatmul.bf16.gmra.mxu0 %v982
          %v996 = vpop.f32.mrf.mxu0
          %v997 = vadd.f32 0.0, %v996
          %v998 = vpop.f32.mrf.mxu0
          %999 = vdwg.mxu0
          %v1000 = vpack.c.bf16 %v997, %v997
          %v1002 = vsel %vm787, %v1000, 0
          %v1005 = vsel %vm822, %v785, 0
          %1007 = vmatpush.bf16.msra.mxu0 0
          %1008 = vmatpush.bf16.msra.mxu0 0
          %1009 = vmatpush.bf16.msra.mxu0 0
          %1010 = vmatpush.bf16.msra.mxu0 0
          %1011 = vmatpush.bf16.msra.mxu0 0
          %1012 = vmatpush.bf16.msra.mxu0 0
          %1013 = vmatpush.bf16.msra.mxu0 0
          %1014 = vmatpush.bf16.msra.mxu0 %v1005
          %1015 = vmatmul.bf16.gmra.mxu0 %v1002
          %v1016 = vpop.f32.mrf.mxu0
          %v1017 = vadd.f32 0.0, %v1016
          %v1018 = vpop.f32.mrf.mxu0
          %1019 = vdwg.mxu0
          %v1020 = vadd.f32 %v941, %v1017
          %1021 = vrot.lane.b32.xlu0 %v842, 104
          %v1022 = vpop.permute.xlu0 %1021
          %1023 = vrot.lane.b32.xlu0 %v847, 104
          %v1024 = vpop.permute.xlu0 %1023
          %v1026 = vsel %vm787, %v1022, 0
          %v1029 = vsel %vm787, %v1024, 0
          %1031 = vmatpush.bf16.xpose.msra.mxu0 0
          %1032 = vmatpush.bf16.xpose.msra.mxu0 0
          %1033 = vmatpush.bf16.xpose.msra.mxu0 0
          %1034 = vmatpush.bf16.xpose.msra.mxu0 0
          %1035 = vmatpush.bf16.xpose.msra.mxu0 0
          %1036 = vmatpush.bf16.xpose.msra.mxu0 0
          %1037 = vmatpush.bf16.xpose.msra.mxu0 0
          %1038 = vmatpush.bf16.xpose.msra.mxu0 %v1029
          %1039 = vmatmul.bf16.gmra.mxu0 %v1026
          %v1040 = vpop.f32.mrf.mxu0
          %v1041 = vadd.f32 0.0, %v1040
          %v1042 = vpop.f32.mrf.mxu0
          %1043 = vdwg.mxu0
          %v1044 = vsel %vm787, %v1041, -inf
          %1045 = vmax.xlane.f32.xlu0 %v1044
          %v1046 = vpop.xlane.xlu0 %1045
          %v1047 = vsub.f32 %v1041, %v1046
          %v1048 = vmul.f32 %v1047, 1.442695
          %v1049 = vpow.pop %v1048
          %v1050 = vsel %vm787, %v1049, 0.0
          %1051 = vadd.xlane.f32.xlu0 %v1050
          %v1052 = vpop.xlane.xlu0 %1051
          %v1053 = vrcp.pop %v1052
          %v1054 = vmul.f32 %v1049, %v1053
          %v1055 = vpack.c.bf16 %v1054, %v1054
          %1056 = vrot.lane.b32.xlu0 %v883, 104
          %v1057 = vpop.permute.xlu0 %1056
          %v1059 = vsel %vm787, %v1055, 0
          %v1062 = vsel %vm822, %v1057, 0
          %1064 = vmatpush.bf16.msra.mxu0 0
          %1065 = vmatpush.bf16.msra.mxu0 0
          %1066 = vmatpush.bf16.msra.mxu0 0
          %1067 = vmatpush.bf16.msra.mxu0 0
          %1068 = vmatpush.bf16.msra.mxu0 0
          %1069 = vmatpush.bf16.msra.mxu0 0
          %1070 = vmatpush.bf16.msra.mxu0 0
          %1071 = vmatpush.bf16.msra.mxu0 %v1062
          %1072 = vmatmul.bf16.gmra.mxu0 %v1059
          %v1073 = vpop.f32.mrf.mxu0
          %v1074 = vadd.f32 0.0, %v1073
          %v1075 = vpop.f32.mrf.mxu0
          %1076 = vdwg.mxu0
          %v1077 = vpack.c.bf16 %v1074, %v1074
          %v1079 = vsel %vm787, %v1077, 0
          %v1082 = vsel %vm822, %v786, 0
          %1084 = vmatpush.bf16.msra.mxu0 0
          %1085 = vmatpush.bf16.msra.mxu0 0
          %1086 = vmatpush.bf16.msra.mxu0 0
          %1087 = vmatpush.bf16.msra.mxu0 0
          %1088 = vmatpush.bf16.msra.mxu0 0
          %1089 = vmatpush.bf16.msra.mxu0 0
          %1090 = vmatpush.bf16.msra.mxu0 0
          %1091 = vmatpush.bf16.msra.mxu0 %v1082
          %1092 = vmatmul.bf16.gmra.mxu0 %v1079
          %v1093 = vpop.f32.mrf.mxu0
          %v1094 = vadd.f32 0.0, %v1093
          %v1095 = vpop.f32.mrf.mxu0
          %1096 = vdwg.mxu0
          %v1097 = vadd.f32 %v1020, %v1094
          %v1098 = vadd.f32 %v636, %v1097
          %v1099 = vld [vmem:[%s10] sm:$0x1]
          %v1101 = vperm.slane %v1099, 0
          %v1103 = vadd.f32 %v1098, %v1101
          %1104 = vst.msk [vmem:[#allocation2] sm:$0xff] %vm639, %v1103
          %v1105 = vld [vmem:[%s11] sm:$0x1]
          %v1106 = vld [vmem:[%s12] sm:$0x1]
          %v1107 = vsel %vm639, %v1103, 0.0
          %1108 = vadd.xlane.f32.xlu0 %v1107
          %v1109 = vpop.xlane.xlu0 %1108
          %v1110 = vmul.f32 %v1109, %v649
          %v1111 = vsub.f32 %v1103, %v1110
          %v1112 = vmul.f32 %v1111, %v1111
          %v1113 = vsel %vm639, %v1112, 0.0
          %1114 = vadd.xlane.f32.xlu0 %v1113
          %v1115 = vpop.xlane.xlu0 %1114
          %v1116 = vmul.f32 %v1115, %v649
          %v1117 = vadd.f32 %v1116, 1e-05
          %v1118 = vrsqrt.pop %v1117
          %v1119 = vmul.f32 %v1118, %v1117
          %v1120 = vmul.f32 %v1119, %v1118
          %v1121 = vmul.f32 0.5, %v1120
          %v1122 = vsub.f32 1.5, %v1121
          %v1123 = vmul.f32 %v1118, %v1122
          %vm1124 = vweird.f32 %v1117
          %vm1125 = vweird.f32 %v1118
          %vm1126 = vmor %vm1124, %vm1125
          %v1127 = vsel %vm1126, %v1118, %v1123
          %v1128 = vmul.f32 %v1111, %v1127
          %v1130 = vperm.slane %v1105, 0
          %v1132 = vmul.f32 %v1128, %v1130
          %v1134 = vperm.slane %v1106, 0
          %v1136 = vadd.f32 %v1132, %v1134
          %1137 = vst.msk [vmem:[#allocation3] sm:$0xff] %vm639, %v1136
          %1138 = vst.msk [vmem:[#allocation4] sm:$0xff] %vm639, 0.0
        $region100: #{tpu_custom_call.1} parent=87 // pred_fallthru
          _
        %v1139 = vld [vmem:[#allocation3] sm:$0xff]
        %v1140 = vpack.c.bf16 %v1139, %v1139
        %v1141 = vld [vmem:[#allocation8] sm:$0xf]
        %v1142 = vld [vmem:[#allocation8 + $0x4] sm:$0xf]
        %v1143 = vld [vmem:[#allocation8 + $0x8] sm:$0xf]
        %v1144 = vld [vmem:[#allocation8 + $0xc] sm:$0xf]
        %v1145 = vld [vmem:[%s624] sm:$0x1]
        %v1147 = vperm.slane %v1145, 0
        %v1153 = vunpack.c.l.b16 %v1141
        %v1154 = vunpack.c.l.b16 %v1142
        %v1155 = vunpack.c.l.b16 %v1143
        %v1156 = vunpack.c.l.b16 %v1144
        %v1157 = vpack.c.b16 %v1154, %v1153
        %v1158 = vpack.c.b16 %v1156, %v1155
        %vm1161 = vcmask 261120
        %v1163 = vsel %vm1161, %v1140, 0
        %1165 = vmatpush.bf16.msra.mxu0 0
        %1166 = vmatpush.bf16.msra.mxu0 0
        %1167 = vmatpush.bf16.msra.mxu0 0
        %1168 = vmatpush.bf16.msra.mxu0 0
        %1169 = vmatpush.bf16.msra.mxu0 0
        %1170 = vmatpush.bf16.msra.mxu0 0
        %1171 = vmatpush.bf16.msra.mxu0 %v1158
        %1172 = vmatpush.bf16.msra.mxu0 %v1157
        %1173 = vmatmul.bf16.gmra.mxu0 %v1163
        %v1174 = vpop.f32.mrf.mxu0
        %v1175 = vadd.f32 %v1147, %v1174
        %v1176 = vpop.f32.mrf.mxu0
        %1177 = vdwg.mxu0
        %v1178 = vmul.f32 %v1175, 0.5
        %v1179 = vmul.f32 %v1175, 0.70710677
        %v1180 = vmul.f32 %v1179, %v1179
        %v1181 = vmin.f32 16.0, %v1180
        %v1182 = vmul.f32 %v1181, 2.1237322e-06
        %v1183 = vadd.f32 %v1182, 0.00028619796
        %v1184 = vmul.f32 %v1181, %v1183
        %v1185 = vadd.f32 %v1184, 0.0036580483
        %v1186 = vmul.f32 %v1181, %v1185
        %v1187 = vadd.f32 %v1186, 0.05243302
        %v1188 = vmul.f32 %v1181, %v1187
        %v1189 = vadd.f32 %v1188, 0.18741608
        %v1190 = vmul.f32 %v1181, %v1189
        %v1191 = vadd.f32 %v1190, 1.1283791
        %v1192 = vmul.f32 %v1179, %v1191
        %v1193 = vmul.f32 %v1181, 3.8918573e-05
        %v1194 = vadd.f32 %v1193, 0.001143296
        %v1195 = vmul.f32 %v1181, %v1194
        %v1196 = vadd.f32 %v1195, 0.014752088
        %v1197 = vmul.f32 %v1181, %v1196
        %v1198 = vadd.f32 %v1197, 0.112945676
        %v1199 = vmul.f32 %v1181, %v1198
        %v1200 = vadd.f32 %v1199, 0.4994258
        %v1201 = vmul.f32 %v1181, %v1200
        %v1202 = vadd.f32 %v1201, 1.0
        %v1203 = vrcp.pop %v1202
        %v1204 = vmul.f32 %v1202, %v1203
        %v1205 = vsub.f32 1.0, %v1204
        %v1206 = vmul.f32 %v1203, %v1205
        %v1207 = vadd.f32 %v1203, %v1206
        %vm1208 = vweird.f32 %v1202
        %vm1209 = vweird.f32 %v1203
        %vm1210 = vmor %vm1208, %vm1209
        %v1211 = vsel %vm1210, %v1203, %v1207
        %v1212 = vand.u32 2147483647, %v1202
        %vm1213 = vcmp.eq.f32.partialorder %v1212, 8.507059e+37
        %v1214 = vand.u32 %v1202, 2147483648
        %v1215 = vor.u32 1.1754944e-38, %v1214
        %v1216 = vsel %vm1213, %v1215, %v1211
        %v1217 = vmul.f32 %v1192, %v1216
        %v1218 = vmin.f32 %v1217, 1.0
        %v1219 = vmax.f32 %v1218, -1.0
        %v1220 = vadd.f32 %v1219, 1.0
        %v1221 = vmul.f32 %v1178, %v1220
        %v1222 = vld [vmem:[#allocation4] sm:$0xff]
        %v1223 = vpack.c.bf16 %v1221, %v1221
        %v1224 = vld [vmem:[%s629] sm:$0xf]
        %v1225 = vld [vmem:[%s629 + $0x4] sm:$0xf]
        %v1226 = vld [vmem:[%s629 + $0x8] sm:$0xf]
        %v1227 = vld [vmem:[%s629 + $0xc] sm:$0xf]
        %v1228 = vld [vmem:[%s629 + $0x10] sm:$0xf]
        %v1229 = vld [vmem:[%s629 + $0x14] sm:$0xf]
        %v1230 = vld [vmem:[%s629 + $0x18] sm:$0xf]
        %v1231 = vld [vmem:[%s629 + $0x1c] sm:$0xf]
        %v1232 = vld [vmem:[%s629 + $0x20] sm:$0xf]
        %v1233 = vld [vmem:[%s629 + $0x24] sm:$0xf]
        %v1234 = vld [vmem:[%s629 + $0x28] sm:$0xf]
        %v1235 = vld [vmem:[%s629 + $0x2c] sm:$0xf]
        %v1236 = vld [vmem:[%s629 + $0x30] sm:$0xf]
        %v1237 = vld [vmem:[%s629 + $0x34] sm:$0xf]
        %v1238 = vld [vmem:[%s629 + $0x38] sm:$0xf]
        %v1239 = vld [vmem:[%s629 + $0x3c] sm:$0xf]
        %v1256 = vunpack.c.l.b16 %v1224
        %v1257 = vunpack.c.l.b16 %v1225
        %v1258 = vunpack.c.l.b16 %v1226
        %v1259 = vunpack.c.l.b16 %v1227
        %v1260 = vunpack.c.l.b16 %v1228
        %v1261 = vunpack.c.l.b16 %v1229
        %v1262 = vunpack.c.l.b16 %v1230
        %v1263 = vunpack.c.l.b16 %v1231
        %v1264 = vunpack.c.l.b16 %v1232
        %v1265 = vunpack.c.l.b16 %v1233
        %v1266 = vunpack.c.l.b16 %v1234
        %v1267 = vunpack.c.l.b16 %v1235
        %v1268 = vunpack.c.l.b16 %v1236
        %v1269 = vunpack.c.l.b16 %v1237
        %v1270 = vunpack.c.l.b16 %v1238
        %v1271 = vunpack.c.l.b16 %v1239
        %v1272 = vpack.c.b16 %v1257, %v1256
        %v1273 = vpack.c.b16 %v1259, %v1258
        %v1274 = vpack.c.b16 %v1261, %v1260
        %v1275 = vpack.c.b16 %v1263, %v1262
        %v1276 = vpack.c.b16 %v1265, %v1264
        %v1277 = vpack.c.b16 %v1267, %v1266
        %v1278 = vpack.c.b16 %v1269, %v1268
        %v1279 = vpack.c.b16 %v1271, %v1270
        %1288 = vmatpush.bf16.msra.mxu0 %v1279
        %1289 = vmatpush.bf16.msra.mxu0 %v1278
        %1290 = vmatpush.bf16.msra.mxu0 %v1277
        %1291 = vmatpush.bf16.msra.mxu0 %v1276
        %1292 = vmatpush.bf16.msra.mxu0 %v1275
        %1293 = vmatpush.bf16.msra.mxu0 %v1274
        %1294 = vmatpush.bf16.msra.mxu0 %v1273
        %1295 = vmatpush.bf16.msra.mxu0 %v1272
        %1296 = vmatmul.bf16.gmra.mxu0 %v1223
        %v1297 = vpop.f32.mrf.mxu0
        %v1298 = vadd.f32 0.0, %v1297
        %v1299 = vpop.f32.mrf.mxu0
        %1300 = vdwg.mxu0
        %v1301 = vadd.f32 %v1222, %v1298
        %1302 = vst.msk [vmem:[#allocation4] sm:$0xff] %vm1161, %v1301
        // Predicated region
        $region101: #{tpu_custom_call.1} parent=87 // pred_check
          %p1303 = pneg %p632
        $region102: #{tpu_custom_call.1} parent=87 // pred_check_branch
          %1305 = sbr.rel (%p1303) target = $region104
        $region103: #{tpu_custom_call.1} parent=87 // pred_region
          %v1306 = vld [vmem:[#allocation2] sm:$0xff]
          %v1307 = vld [vmem:[#allocation4] sm:$0xff]
          %v1308 = vadd.f32 %v1306, %v1307
          %v1309 = vld [vmem:[%s16] sm:$0x1]
          %v1311 = vperm.slane %v1309, 0
          %v1313 = vadd.f32 %v1308, %v1311
          %1314 = vst.msk [vmem:[%s617] sm:$0xff] %vm1161, %v1313
        $region104: #{tpu_custom_call.1} parent=87 // pred_fallthru
          _
        %s1315 = sand.u32 %s430, 1
        %s1316 = scalar_lea.sflag [#allocation7], %s1315
        %s1317 = sand.u32 %s430, 1
        %s1318 = smul.addr %s1317, 8
        %s1319 = scalar_lea.vmem [#allocation10], %s1318
        // Predicated region
        $region105: #{tpu_custom_call.1} parent=87 // pred_check
          %p1320 = pneg %p440
        $region106: #{tpu_custom_call.1} parent=87 // pred_check_branch
          %1322 = sbr.rel (%p1320) target = $region108
        $region107: #{tpu_custom_call.1} parent=87 // pred_region
          %1324 = vsyncadd %s1316, 0
          %s1325 = smul.addr %s37, 8
          %s1326 = scalar_lea.hbm %s17, %s1325
          %s1328 = sshll.u32 %s1319, 4
          %s1329 = int_to_ptr.vmem [resolvable:$true] %s1328
          %s1330 = sshll.u32 %s1326, 4
          %s1331 = int_to_ptr.hbm [resolvable:$true] %s1330
          %1333 = dma.vmem_to_hbm [thread:$0]  %s1329, 128, %s1331, %s1316
        $region108: #{tpu_custom_call.1} parent=87 // pred_fallthru
          _
      $region88: #{tpu_custom_call.1} parent=5 // pred_fallthru
        _
      %p1334 = scmp.le.s32.totalorder 2, %s28
      // Predicated region
      $region109: #{tpu_custom_call.1} parent=5 // pred_check
        %p1335 = pneg %p1334
      $region110: #{tpu_custom_call.1} parent=5 // pred_check_branch
        %1337 = sbr.rel (%p1335) target = $region112
      $region111: #{tpu_custom_call.1} parent=5 // pred_region
        %s1338 = ssub.s32 %s28, 2
        // Predicated region
        $region113: #{tpu_custom_call.1} parent=111 // pred_check
          %p1339 = pneg %p446
        $region114: #{tpu_custom_call.1} parent=111 // pred_check_branch
          %1341 = sbr.rel (%p1339) target = $region116
        $region115: #{tpu_custom_call.1} parent=111 // pred_region
          %s1342 = sand.u32 %s431, 1
          %s1343 = scalar_lea.sflag [#allocation7], %s1342
          %s1344 = sand.u32 %s431, 1
          %s1345 = smul.addr %s1344, 8
          %s1346 = scalar_lea.vmem [#allocation10], %s1345
          %1348 = dma.done %s1343, 128
        $region116: #{tpu_custom_call.1} parent=111 // pred_fallthru
          _
      $region112: #{tpu_custom_call.1} parent=5 // pred_fallthru
        _
    $region6: #{tpu_custom_call.1} parent=1 // loop_footer
      %s32 = sadd.s32 1, %s28
    $region7: #{tpu_custom_call.1} parent=1 // loop_footer_branch
      %27 = sbr.rel target = $region3
    $region8: #{tpu_custom_call.1} parent=1 // loop_exit
      _
    %1349 = vsyncpa [#allocation6], 1
    %s1350 = scalar_lea.sflag [#allocation6], 1
    %1351 = vsyncpa %s1350, 1
    %1352 = vsyncpa [#allocation9], 1
    %1353 = vsyncpa [#allocation7], 1
    %s1354 = scalar_lea.sflag [#allocation7], 1
    %1355 = vsyncpa %s1354, 1

</llo_original>
